<compile_context>
chip_gen: v7x
topology: tpu7x:2x2x1
jax: 0.10.0
libtpu: 0.0.40
codegen_flags: <defaults>
</compile_context>

<pallas_src>
import math
from functools import partial

import jax
import jax.numpy as jnp
from jax.experimental import pallas as pl
from jax.experimental.pallas import tpu as pltpu

_NEG = jnp.float32(-1e30)  # finite stand-in for -inf (robust on fully-masked rows)


def _sdpa_kernel(*refs, scale, has_prev, has_am, has_kp, want_attn, want_scores, H, Dv):
    """One (batch, q-tile) grid step, all heads fused.

    Block views:
      q      : [1, H, tq, Dk]
      k      : [1, H, Dk, Lk]
      v      : [1, H, Lk, Dv]
      prev   : [1, H, tq, Lk]     (only if has_prev)
      am     : [1, tq, Lk]  f32   (only if has_am; additive, -1e30 at masked)
      kp     : [1, 1,  Lk]  f32   (only if has_kp; additive, -1e30 at padded keys)
      out    : [1, tq, H*Dv]      (lane-dense slab)
      attn   : [1, H, tq, Lk]     (only if want_attn)
      scores : [1, H, tq, Lk]     (only if want_scores)
    """
    it = iter(refs)
    q_ref, k_ref, v_ref = next(it), next(it), next(it)
    prev_ref = next(it) if has_prev else None
    am_ref = next(it) if has_am else None
    kp_ref = next(it) if has_kp else None
    out_ref = next(it)
    attn_ref = next(it) if want_attn else None
    scores_ref = next(it) if want_scores else None

    # Fold scale into q: H*tq*Dk multiplies instead of H*tq*Lk on the scores tile.
    q = q_ref[0] * scale          # [H, tq, Dk], native dtype
    k = k_ref[0]                  # [H, Dk, Lk]
    v = v_ref[0]                  # [H, Lk, Dv]

    # attn_scores = matmul(q, k) * scale   (head-batched on the MXU, f32 accumulate)
    scores = jnp.einsum("hqd,hdk->hqk", q, k, preferred_element_type=jnp.float32)
    if has_prev:                  # residual attention (Realformer)
        scores = scores + prev_ref[0].astype(jnp.float32)
    if has_am:                    # attn_mask (bool folded to additive -1e30 / float additive)
        scores = scores + am_ref[...]
    if has_kp:                    # key_padding_mask as additive per-key row bias
        scores = scores + kp_ref[...]

    # softmax over keys (f32 math; exp on the EUP)
    mx = jnp.max(scores, axis=-1, keepdims=True)
    e = jnp.exp(scores - mx)
    s = jnp.sum(e, axis=-1, keepdims=True)
    attn = e / s

    # TODO(synk): nn.Dropout(attn_dropout) — attn_dropout=0.0 so it is the identity here.

    # output = matmul(attn_weights, v)   (head-batched on the MXU, f32 accumulate)
    out = jnp.einsum("hqk,hkd->hqd", attn.astype(v.dtype), v,
                     preferred_element_type=jnp.float32)   # [H, tq, Dv]

    # Lane-dense output slab [tq, H*Dv]: per-head static lane-slice stores.
    for h in range(H):
        out_ref[0, :, h * Dv:(h + 1) * Dv] = out[h].astype(out_ref.dtype)

    if want_attn:
        attn_ref[0] = attn.astype(attn_ref.dtype)
    if want_scores:
        scores_ref[0] = scores.astype(scores_ref.dtype)


def _vmem_budget_and_limit():
    """Generation-aware VMEM budget (v5e/v6e: 128 MiB physical, v7x: 64 MiB)."""
    try:
        info = pltpu.get_tpu_info()
        phys = int(getattr(info, "vmem_capacity_bytes", 0)) or (64 << 20)
    except Exception:
        phys = 64 << 20
    limit = min(int(phys * 0.85), 112 << 20)   # scoped-VMEM limit for this kernel
    budget = int(limit * 0.70)                 # tile-chooser budget (leave headroom)
    return budget, limit


def _choose_q_tile(Lq, step_bytes, budget_bytes, batch):
    """Pick the q-tile size. Prefers the largest multiple-of-8 divisor of Lq that fits
    the VMEM budget; otherwise the largest multiple-of-8 tile with a ragged last block.
    Never falls back to an untiled Lq that blows the budget, and keeps >= 2 total grid
    steps when possible (v7x megacore)."""
    if Lq <= 8:
        return Lq
    cap = Lq if batch >= 2 else min(Lq, max(8, ((Lq // 2) // 8) * 8))
    best = None
    t = (cap // 8) * 8
    while t >= 8:                                  # clean divisors first
        if Lq % t == 0 and step_bytes(t) <= budget_bytes:
            best = t
            break
        t -= 8
    if best is None:                               # ragged last block (cdiv grid)
        t = (cap // 8) * 8
        while t >= 8:
            if step_bytes(t) <= budget_bytes:
                best = t
                break
            t -= 8
    if best is None:
        # TODO(synk): Lk-axis online-softmax tiling for sequences too long even for tq=8.
        best = 8
    return best


def scaled_dot_product_attention(q, k, v, prev=None, key_padding_mask=None,
                                 attn_mask=None, *, n_heads, d_model,
                                 res_attention=False, want_attn=True):
    """Pallas port of _ScaledDotProductAttention.forward (attn_dropout=0, lsa=False).

    Returns (output, attn_weights[, attn_scores]) like the PyTorch module; set
    want_attn=False to skip the (large) attention-weights HBM writeback entirely
    (attn_weights is then returned as None)."""
    B, H, Lq, Dk = q.shape
    Lk = k.shape[-1]
    Dv = v.shape[-1]
    assert H == n_heads

    head_dim = d_model // n_heads
    scale = float(head_dim ** (-0.5))   # nn.Parameter(head_dim**-0.5), lsa=False -> constant

    has_prev = prev is not None
    has_am = attn_mask is not None
    has_kp = key_padding_mask is not None
    want_scores = bool(res_attention)

    # --- glue: small additive biases (no [B, Lq, Lk] materialization) ------------
    am_bias = None
    if has_am:
        if attn_mask.dtype == jnp.bool_:
            am_bias = jnp.where(attn_mask, _NEG, jnp.float32(0.0)).astype(jnp.float32)
        else:  # additive float attn_mask (matches the PyTorch `+=` branch)
            am_bias = attn_mask.astype(jnp.float32)
        am_bias = am_bias.reshape(1, Lq, Lk)

    kp_bias = None
    if has_kp:
        kp_bias = jnp.where(key_padding_mask, _NEG, jnp.float32(0.0)).astype(jnp.float32)
        kp_bias = kp_bias.reshape(B, 1, Lk)

    # --- q-tile selection against a generation-aware VMEM budget -----------------
    itm = q.dtype.itemsize
    prev_itm = prev.dtype.itemsize if has_prev else 0
    attn_itm = q.dtype.itemsize     # attn/scores stored in the model dtype
    out_itm = q.dtype.itemsize

    def step_bytes(tq):
        per = H * tq * Dk * itm                         # q block
        per += H * Dk * Lk * itm + H * Lk * Dv * itm    # k, v blocks
        if has_prev:
            per += H * tq * Lk * prev_itm
        if has_am:
            per += tq * Lk * 4
        if has_kp:
            per += Lk * 4
        per += tq * H * Dv * out_itm                    # out slab block
        if want_attn:
            per += H * tq * Lk * attn_itm
        if want_scores:
            per += H * tq * Lk * attn_itm
        live = 2 * H * tq * Lk * 4                      # f32 scores + exp working set
        return 2 * per + live                           # double-buffered pipeline

    budget, vmem_limit = _vmem_budget_and_limit()
    tq = _choose_q_tile(Lq, step_bytes, budget, B)
    num_q = -(-Lq // tq)                                # cdiv (ragged last block allowed)

    # --- specs / inputs, only wiring what is needed ------------------------------
    in_specs = [
        pl.BlockSpec((1, H, tq, Dk), lambda b, i: (b, 0, i, 0)),
        pl.BlockSpec((1, H, Dk, Lk), lambda b, i: (b, 0, 0, 0)),
        pl.BlockSpec((1, H, Lk, Dv), lambda b, i: (b, 0, 0, 0)),
    ]
    inputs = [q, k, v]
    if has_prev:
        in_specs.append(pl.BlockSpec((1, H, tq, Lk), lambda b, i: (b, 0, i, 0)))
        inputs.append(prev)                              # native dtype, cast in-kernel
    if has_am:
        in_specs.append(pl.BlockSpec((1, tq, Lk), lambda b, i: (0, i, 0)))
        inputs.append(am_bias)
    if has_kp:
        in_specs.append(pl.BlockSpec((1, 1, Lk), lambda b, i: (b, 0, 0)))
        inputs.append(kp_bias)

    HDv = H * Dv
    out_shapes = [jax.ShapeDtypeStruct((B, Lq, HDv), q.dtype)]
    out_specs = [pl.BlockSpec((1, tq, HDv), lambda b, i: (b, i, 0))]
    if want_attn:
        out_shapes.append(jax.ShapeDtypeStruct((B, H, Lq, Lk), q.dtype))
        out_specs.append(pl.BlockSpec((1, H, tq, Lk), lambda b, i: (b, 0, i, 0)))
    if want_scores:
        out_shapes.append(jax.ShapeDtypeStruct((B, H, Lq, Lk), q.dtype))
        out_specs.append(pl.BlockSpec((1, H, tq, Lk), lambda b, i: (b, 0, i, 0)))

    # --- cost estimate (this kernel is HBM/EUP bound for small head dims) --------
    flops = 2 * B * H * Lq * Lk * (Dk + Dv)
    transcendentals = B * H * Lq * Lk
    bytes_accessed = sum(int(x.size) * x.dtype.itemsize for x in inputs)
    bytes_accessed += sum(math.prod(s.shape) * jnp.dtype(s.dtype).itemsize for s in out_shapes)

    kernel = partial(_sdpa_kernel, scale=scale, has_prev=has_prev, has_am=has_am,
                     has_kp=has_kp, want_attn=want_attn, want_scores=want_scores,
                     H=H, Dv=Dv)

    outs = pl.pallas_call(
        kernel,
        out_shape=tuple(out_shapes),
        grid_spec=pltpu.PrefetchScalarGridSpec(
            num_scalar_prefetch=0,
            grid=(B, num_q),
            in_specs=in_specs,
            out_specs=out_specs,
        ),
        compiler_params=pltpu.CompilerParams(
            dimension_semantics=("parallel", "parallel"),
            vmem_limit_bytes=int(vmem_limit),
        ),
        cost_estimate=pl.CostEstimate(flops=flops, transcendentals=transcendentals,
                                      bytes_accessed=bytes_accessed),
    )(*inputs)

    # lane-dense slab -> module layout [B, H, Lq, Dv]
    out = outs[0].reshape(B, Lq, H, Dv).transpose(0, 2, 1, 3)

    idx = 1
    attn_out = None
    if want_attn:
        attn_out = outs[idx]
        idx += 1
    scores_out = None
    if want_scores:
        scores_out = outs[idx]
        idx += 1

    if res_attention:
        return out, attn_out, scores_out
    return out, attn_out


def _reference(q, k, v, prev, key_padding_mask, attn_mask, scale):
    """Pure-JAX reference mirroring the PyTorch module (masks as additive -1e30)."""
    scores = jnp.einsum("bhqd,bhdk->bhqk", q, k) * scale
    if prev is not None:
        scores = scores + prev
    if attn_mask is not None:
        if attn_mask.dtype == jnp.bool_:
            scores = scores + jnp.where(attn_mask, _NEG, jnp.float32(0.0))[None]
        else:
            scores = scores + attn_mask[None]
    if key_padding_mask is not None:
        scores = scores + jnp.where(key_padding_mask, _NEG,
                                    jnp.float32(0.0))[:, None, None, :]
    attn = jax.nn.softmax(scores, axis=-1)
    out = jnp.einsum("bhqk,bhkd->bhqd", attn, v)
    return out, attn, scores


if __name__ == "__main__":
    # Small shapes consistent with the module: d_model=64, n_heads=8 -> head_dim=8
    bs, n_heads, seq_len, d_model = 2, 8, 16, 64
    head_dim = d_model // n_heads

    key = jax.random.PRNGKey(0)
    kq, kk, kv, kp = jax.random.split(key, 4)
    q = jax.random.normal(kq, (bs, n_heads, seq_len, head_dim), dtype=jnp.float32)
    k = jax.random.normal(kk, (bs, n_heads, head_dim, seq_len), dtype=jnp.float32)
    v = jax.random.normal(kv, (bs, n_heads, seq_len, head_dim), dtype=jnp.float32)
    prev = 0.1 * jax.random.normal(kp, (bs, n_heads, seq_len, seq_len), dtype=jnp.float32)

    # boolean attn_mask [1, seq_len, seq_len]: causal (mask strictly-upper triangle)
    attn_mask = jnp.triu(jnp.ones((seq_len, seq_len), dtype=bool), k=1)[None, :, :]
    # boolean key_padding_mask [bs, seq_len]: pad out the last two keys of batch 1
    key_padding_mask = jnp.zeros((bs, seq_len), dtype=bool).at[1, -2:].set(True)

    scale = head_dim ** (-0.5)

    # --- case 1: common path (prev=None, res_attention=False) --------------------
    out, attn = scaled_dot_product_attention(
        q, k, v, prev=None,
        key_padding_mask=key_padding_mask, attn_mask=attn_mask,
        n_heads=n_heads, d_model=d_model, res_attention=False)
    out = jax.block_until_ready(out)
    attn = jax.block_until_ready(attn)
    o_ref, a_ref, _ = _reference(q, k, v, None, key_padding_mask, attn_mask, scale)
    assert jnp.allclose(out, o_ref, atol=2e-3, rtol=2e-3)
    assert jnp.allclose(attn, a_ref, atol=2e-3, rtol=2e-3)

    # --- case 2: residual attention path (prev given, res_attention=True) --------
    out2, attn2, scores2 = scaled_dot_product_attention(
        q, k, v, prev=prev,
        key_padding_mask=key_padding_mask, attn_mask=attn_mask,
        n_heads=n_heads, d_model=d_model, res_attention=True)
    out2 = jax.block_until_ready(out2)
    o2, a2, s2 = _reference(q, k, v, prev, key_padding_mask, attn_mask, scale)
    assert jnp.allclose(out2, o2, atol=2e-3, rtol=2e-3)
    assert jnp.allclose(attn2, a2, atol=2e-3, rtol=2e-3)
    assert jnp.allclose(scores2, s2, atol=2e-3, rtol=2e-3)

    # --- case 3: fast path with the attention-weights writeback dropped ----------
    out3, attn3 = scaled_dot_product_attention(
        q, k, v, prev=None, key_padding_mask=None, attn_mask=None,
        n_heads=n_heads, d_model=d_model, res_attention=False, want_attn=False)
    out3 = jax.block_until_ready(out3)
    o3, _, _ = _reference(q, k, v, None, None, None, scale)
    assert attn3 is None
    assert jnp.allclose(out3, o3, atol=2e-3, rtol=2e-3)

    print("KERNEL_OK")
</pallas_src>

<mosaic_0001>
module attributes {stable_mosaic.version = 11 : i64} {
  func.func @_sdpa_kernel(%arg0: i32, %arg1: i32, %arg2: memref<1x8x16x8xf32, #tpu.memory_space<vmem>>, %arg3: memref<1x8x8x16xf32, #tpu.memory_space<vmem>>, %arg4: memref<1x8x16x8xf32, #tpu.memory_space<vmem>>, %arg5: memref<1x16x16xf32, #tpu.memory_space<vmem>>, %arg6: memref<1x1x16xf32, #tpu.memory_space<vmem>>, %arg7: memref<1x16x64xf32, #tpu.memory_space<vmem>>, %arg8: memref<1x8x16x16xf32, #tpu.memory_space<vmem>>) attributes {dimension_semantics = [#tpu.dimension_semantics<parallel>, #tpu.dimension_semantics<parallel>], iteration_bounds = array<i64: 2, 1>, scalar_prefetch = 0 : i64, scratch_operands = 0 : i64, tpu.core_type = #tpu.core_type<tc>, window_params = [{transform_indices = @transform_0, window_bounds = array<i64: 1, 8, 16, 8>}, {transform_indices = @transform_1, window_bounds = array<i64: 1, 8, 8, 16>}, {transform_indices = @transform_2, window_bounds = array<i64: 1, 8, 16, 8>}, {transform_indices = @transform_3, window_bounds = array<i64: 1, 16, 16>}, {transform_indices = @transform_4, window_bounds = array<i64: 1, 1, 16>}, {transform_indices = @transform_5, window_bounds = array<i64: 1, 16, 64>}, {transform_indices = @transform_6, window_bounds = array<i64: 1, 8, 16, 16>}]} {
    %c0 = arith.constant 0 : index
    %c0_0 = arith.constant 0 : index
    %c0_1 = arith.constant 0 : index
    %c0_2 = arith.constant 0 : index
    %0 = vector.load %arg2[%c0, %c0_0, %c0_1, %c0_2] : memref<1x8x16x8xf32, #tpu.memory_space<vmem>>, vector<1x8x16x8xf32>
    %1 = vector.shape_cast %0 : vector<1x8x16x8xf32> to vector<8x16x8xf32>
    %cst = arith.constant 0.353553385 : f32
    %2 = vector.broadcast %cst : f32 to vector<8x16x8xf32>
    %3 = arith.mulf %1, %2 : vector<8x16x8xf32>
    %c0_3 = arith.constant 0 : index
    %c0_4 = arith.constant 0 : index
    %c0_5 = arith.constant 0 : index
    %c0_6 = arith.constant 0 : index
    %4 = vector.load %arg3[%c0_3, %c0_4, %c0_5, %c0_6] : memref<1x8x8x16xf32, #tpu.memory_space<vmem>>, vector<1x8x8x16xf32>
    %5 = vector.shape_cast %4 : vector<1x8x8x16xf32> to vector<8x8x16xf32>
    %c0_7 = arith.constant 0 : index
    %c0_8 = arith.constant 0 : index
    %c0_9 = arith.constant 0 : index
    %c0_10 = arith.constant 0 : index
    %6 = vector.load %arg4[%c0_7, %c0_8, %c0_9, %c0_10] : memref<1x8x16x8xf32, #tpu.memory_space<vmem>>, vector<1x8x16x8xf32>
    %7 = vector.shape_cast %6 : vector<1x8x16x8xf32> to vector<8x16x8xf32>
    "tpu.trace_start"() <{level = 10 : i32, message = "hqd,hdk->hqk"}> : () -> ()
    %cst_11 = arith.constant dense<0.000000e+00> : vector<8x16x16xf32>
    %8 = tpu.matmul %3, %5, %cst_11 {dimension_numbers = #tpu.dot_dimension_numbers<[2], [1], [1], [2], [0, 0, 0, 1, 1, 2], [0], [0]>} : vector<8x16x8xf32>, vector<8x8x16xf32>, vector<8x16x16xf32> -> vector<8x16x16xf32>
    "tpu.trace_stop"() : () -> ()
    %c0_12 = arith.constant 0 : index
    %c0_13 = arith.constant 0 : index
    %c0_14 = arith.constant 0 : index
    %9 = vector.load %arg5[%c0_12, %c0_13, %c0_14] : memref<1x16x16xf32, #tpu.memory_space<vmem>>, vector<1x16x16xf32>
    %10 = vector.broadcast %9 : vector<1x16x16xf32> to vector<8x16x16xf32>
    %11 = arith.addf %8, %10 : vector<8x16x16xf32>
    %c0_15 = arith.constant 0 : index
    %c0_16 = arith.constant 0 : index
    %c0_17 = arith.constant 0 : index
    %12 = vector.load %arg6[%c0_15, %c0_16, %c0_17] : memref<1x1x16xf32, #tpu.memory_space<vmem>>, vector<1x1x16xf32>
    %13 = vector.broadcast %12 : vector<1x1x16xf32> to vector<8x16x16xf32>
    %14 = arith.addf %11, %13 : vector<8x16x16xf32>
    %cst_18 = arith.constant dense<0xFF800000> : vector<8x16xf32>
    %15 = vector.multi_reduction <maximumf>, %14, %cst_18 [2] : vector<8x16x16xf32> to vector<8x16xf32>
    %16 = vector.shape_cast %15 : vector<8x16xf32> to vector<8x16x1xf32>
    %17 = vector.broadcast %16 : vector<8x16x1xf32> to vector<8x16x16xf32>
    %18 = arith.subf %14, %17 : vector<8x16x16xf32>
    %19 = math.exp %18 : vector<8x16x16xf32>
    %cst_19 = arith.constant dense<0.000000e+00> : vector<8x16xf32>
    %20 = vector.multi_reduction <add>, %19, %cst_19 [2] : vector<8x16x16xf32> to vector<8x16xf32>
    %21 = vector.shape_cast %20 : vector<8x16xf32> to vector<8x16x1xf32>
    %22 = vector.broadcast %21 : vector<8x16x1xf32> to vector<8x16x16xf32>
    %23 = arith.divf %19, %22 : vector<8x16x16xf32>
    "tpu.trace_start"() <{level = 10 : i32, message = "hqk,hkd->hqd"}> : () -> ()
    %cst_20 = arith.constant dense<0.000000e+00> : vector<8x16x8xf32>
    %24 = tpu.matmul %23, %7, %cst_20 {dimension_numbers = #tpu.dot_dimension_numbers<[2], [1], [1], [2], [0, 0, 0, 1, 1, 2], [0], [0]>} : vector<8x16x16xf32>, vector<8x16x8xf32>, vector<8x16x8xf32> -> vector<8x16x8xf32>
    "tpu.trace_stop"() : () -> ()
    %25 = vector.extract_strided_slice %24 {offsets = [0, 0, 0], sizes = [1, 16, 8], strides = [1, 1, 1]} : vector<8x16x8xf32> to vector<1x16x8xf32>
    %26 = vector.shape_cast %25 : vector<1x16x8xf32> to vector<16x8xf32>
    %c0_21 = arith.constant 0 : index
    %c0_22 = arith.constant 0 : index
    %c0_23 = arith.constant 0 : index
    %27 = vector.load %arg7[%c0_21, %c0_22, %c0_23] : memref<1x16x64xf32, #tpu.memory_space<vmem>>, vector<1x16x8xf32>
    %28 = vector.shape_cast %27 : vector<1x16x8xf32> to vector<16x8xf32>
    %29 = vector.shape_cast %26 : vector<16x8xf32> to vector<1x16x8xf32>
    tpu.vector_store %arg7[%c0_21, %c0_22, %c0_23], %29 {strides = array<i32>} : memref<1x16x64xf32, #tpu.memory_space<vmem>>, vector<1x16x8xf32>,
    %30 = vector.extract_strided_slice %24 {offsets = [1, 0, 0], sizes = [1, 16, 8], strides = [1, 1, 1]} : vector<8x16x8xf32> to vector<1x16x8xf32>
    %31 = vector.shape_cast %30 : vector<1x16x8xf32> to vector<16x8xf32>
    %c0_24 = arith.constant 0 : index
    %c0_25 = arith.constant 0 : index
    %c8 = arith.constant 8 : index
    %32 = vector.load %arg7[%c0_24, %c0_25, %c8] : memref<1x16x64xf32, #tpu.memory_space<vmem>>, vector<1x16x8xf32>
    %33 = vector.shape_cast %32 : vector<1x16x8xf32> to vector<16x8xf32>
    %34 = vector.shape_cast %31 : vector<16x8xf32> to vector<1x16x8xf32>
    tpu.vector_store %arg7[%c0_24, %c0_25, %c8], %34 {strides = array<i32>} : memref<1x16x64xf32, #tpu.memory_space<vmem>>, vector<1x16x8xf32>,
    %35 = vector.extract_strided_slice %24 {offsets = [2, 0, 0], sizes = [1, 16, 8], strides = [1, 1, 1]} : vector<8x16x8xf32> to vector<1x16x8xf32>
    %36 = vector.shape_cast %35 : vector<1x16x8xf32> to vector<16x8xf32>
    %c0_26 = arith.constant 0 : index
    %c0_27 = arith.constant 0 : index
    %c16 = arith.constant 16 : index
    %37 = vector.load %arg7[%c0_26, %c0_27, %c16] : memref<1x16x64xf32, #tpu.memory_space<vmem>>, vector<1x16x8xf32>
    %38 = vector.shape_cast %37 : vector<1x16x8xf32> to vector<16x8xf32>
    %39 = vector.shape_cast %36 : vector<16x8xf32> to vector<1x16x8xf32>
    tpu.vector_store %arg7[%c0_26, %c0_27, %c16], %39 {strides = array<i32>} : memref<1x16x64xf32, #tpu.memory_space<vmem>>, vector<1x16x8xf32>,
    %40 = vector.extract_strided_slice %24 {offsets = [3, 0, 0], sizes = [1, 16, 8], strides = [1, 1, 1]} : vector<8x16x8xf32> to vector<1x16x8xf32>
    %41 = vector.shape_cast %40 : vector<1x16x8xf32> to vector<16x8xf32>
    %c0_28 = arith.constant 0 : index
    %c0_29 = arith.constant 0 : index
    %c24 = arith.constant 24 : index
    %42 = vector.load %arg7[%c0_28, %c0_29, %c24] : memref<1x16x64xf32, #tpu.memory_space<vmem>>, vector<1x16x8xf32>
    %43 = vector.shape_cast %42 : vector<1x16x8xf32> to vector<16x8xf32>
    %44 = vector.shape_cast %41 : vector<16x8xf32> to vector<1x16x8xf32>
    tpu.vector_store %arg7[%c0_28, %c0_29, %c24], %44 {strides = array<i32>} : memref<1x16x64xf32, #tpu.memory_space<vmem>>, vector<1x16x8xf32>,
    %45 = vector.extract_strided_slice %24 {offsets = [4, 0, 0], sizes = [1, 16, 8], strides = [1, 1, 1]} : vector<8x16x8xf32> to vector<1x16x8xf32>
    %46 = vector.shape_cast %45 : vector<1x16x8xf32> to vector<16x8xf32>
    %c0_30 = arith.constant 0 : index
    %c0_31 = arith.constant 0 : index
    %c32 = arith.constant 32 : index
    %47 = vector.load %arg7[%c0_30, %c0_31, %c32] : memref<1x16x64xf32, #tpu.memory_space<vmem>>, vector<1x16x8xf32>
    %48 = vector.shape_cast %47 : vector<1x16x8xf32> to vector<16x8xf32>
    %49 = vector.shape_cast %46 : vector<16x8xf32> to vector<1x16x8xf32>
    tpu.vector_store %arg7[%c0_30, %c0_31, %c32], %49 {strides = array<i32>} : memref<1x16x64xf32, #tpu.memory_space<vmem>>, vector<1x16x8xf32>,
    %50 = vector.extract_strided_slice %24 {offsets = [5, 0, 0], sizes = [1, 16, 8], strides = [1, 1, 1]} : vector<8x16x8xf32> to vector<1x16x8xf32>
    %51 = vector.shape_cast %50 : vector<1x16x8xf32> to vector<16x8xf32>
    %c0_32 = arith.constant 0 : index
    %c0_33 = arith.constant 0 : index
    %c40 = arith.constant 40 : index
    %52 = vector.load %arg7[%c0_32, %c0_33, %c40] : memref<1x16x64xf32, #tpu.memory_space<vmem>>, vector<1x16x8xf32>
    %53 = vector.shape_cast %52 : vector<1x16x8xf32> to vector<16x8xf32>
    %54 = vector.shape_cast %51 : vector<16x8xf32> to vector<1x16x8xf32>
    tpu.vector_store %arg7[%c0_32, %c0_33, %c40], %54 {strides = array<i32>} : memref<1x16x64xf32, #tpu.memory_space<vmem>>, vector<1x16x8xf32>,
    %55 = vector.extract_strided_slice %24 {offsets = [6, 0, 0], sizes = [1, 16, 8], strides = [1, 1, 1]} : vector<8x16x8xf32> to vector<1x16x8xf32>
    %56 = vector.shape_cast %55 : vector<1x16x8xf32> to vector<16x8xf32>
    %c0_34 = arith.constant 0 : index
    %c0_35 = arith.constant 0 : index
    %c48 = arith.constant 48 : index
    %57 = vector.load %arg7[%c0_34, %c0_35, %c48] : memref<1x16x64xf32, #tpu.memory_space<vmem>>, vector<1x16x8xf32>
    %58 = vector.shape_cast %57 : vector<1x16x8xf32> to vector<16x8xf32>
    %59 = vector.shape_cast %56 : vector<16x8xf32> to vector<1x16x8xf32>
    tpu.vector_store %arg7[%c0_34, %c0_35, %c48], %59 {strides = array<i32>} : memref<1x16x64xf32, #tpu.memory_space<vmem>>, vector<1x16x8xf32>,
    %60 = vector.extract_strided_slice %24 {offsets = [7, 0, 0], sizes = [1, 16, 8], strides = [1, 1, 1]} : vector<8x16x8xf32> to vector<1x16x8xf32>
    %61 = vector.shape_cast %60 : vector<1x16x8xf32> to vector<16x8xf32>
    %c0_36 = arith.constant 0 : index
    %c0_37 = arith.constant 0 : index
    %c56 = arith.constant 56 : index
    %62 = vector.load %arg7[%c0_36, %c0_37, %c56] : memref<1x16x64xf32, #tpu.memory_space<vmem>>, vector<1x16x8xf32>
    %63 = vector.shape_cast %62 : vector<1x16x8xf32> to vector<16x8xf32>
    %64 = vector.shape_cast %61 : vector<16x8xf32> to vector<1x16x8xf32>
    tpu.vector_store %arg7[%c0_36, %c0_37, %c56], %64 {strides = array<i32>} : memref<1x16x64xf32, #tpu.memory_space<vmem>>, vector<1x16x8xf32>,
    %c0_38 = arith.constant 0 : index
    %c0_39 = arith.constant 0 : index
    %c0_40 = arith.constant 0 : index
    %c0_41 = arith.constant 0 : index
    %65 = vector.load %arg8[%c0_38, %c0_39, %c0_40, %c0_41] : memref<1x8x16x16xf32, #tpu.memory_space<vmem>>, vector<1x8x16x16xf32>
    %66 = vector.shape_cast %65 : vector<1x8x16x16xf32> to vector<8x16x16xf32>
    %67 = vector.shape_cast %23 : vector<8x16x16xf32> to vector<1x8x16x16xf32>
    tpu.vector_store %arg8[%c0_38, %c0_39, %c0_40, %c0_41], %67 {strides = array<i32>} : memref<1x8x16x16xf32, #tpu.memory_space<vmem>>, vector<1x8x16x16xf32>,
    return
  }
  func.func @transform_0(%arg0: i32, %arg1: i32) -> (i32, i32, i32, i32) {
    %c0_i32 = arith.constant 0 : i32
    %c0_i32_0 = arith.constant 0 : i32
    %c0_i32_1 = arith.constant 0 : i32
    return %arg0, %c0_i32, %arg1, %c0_i32_0 : i32, i32, i32, i32
  }
  func.func @transform_1(%arg0: i32, %arg1: i32) -> (i32, i32, i32, i32) {
    %c0_i32 = arith.constant 0 : i32
    %c0_i32_0 = arith.constant 0 : i32
    %c0_i32_1 = arith.constant 0 : i32
    %c0_i32_2 = arith.constant 0 : i32
    return %arg0, %c0_i32, %c0_i32_0, %c0_i32_1 : i32, i32, i32, i32
  }
  func.func @transform_2(%arg0: i32, %arg1: i32) -> (i32, i32, i32, i32) {
    %c0_i32 = arith.constant 0 : i32
    %c0_i32_0 = arith.constant 0 : i32
    %c0_i32_1 = arith.constant 0 : i32
    %c0_i32_2 = arith.constant 0 : i32
    return %arg0, %c0_i32, %c0_i32_0, %c0_i32_1 : i32, i32, i32, i32
  }
  func.func @transform_3(%arg0: i32, %arg1: i32) -> (i32, i32, i32) {
    %c0_i32 = arith.constant 0 : i32
    %c0_i32_0 = arith.constant 0 : i32
    %c0_i32_1 = arith.constant 0 : i32
    return %c0_i32, %arg1, %c0_i32_0 : i32, i32, i32
  }
  func.func @transform_4(%arg0: i32, %arg1: i32) -> (i32, i32, i32) {
    %c0_i32 = arith.constant 0 : i32
    %c0_i32_0 = arith.constant 0 : i32
    %c0_i32_1 = arith.constant 0 : i32
    return %arg0, %c0_i32, %c0_i32_0 : i32, i32, i32
  }
  func.func @transform_5(%arg0: i32, %arg1: i32) -> (i32, i32, i32) {
    %c0_i32 = arith.constant 0 : i32
    %c0_i32_0 = arith.constant 0 : i32
    return %arg0, %arg1, %c0_i32 : i32, i32, i32
  }
  func.func @transform_6(%arg0: i32, %arg1: i32) -> (i32, i32, i32, i32) {
    %c0_i32 = arith.constant 0 : i32
    %c0_i32_0 = arith.constant 0 : i32
    %c0_i32_1 = arith.constant 0 : i32
    return %arg0, %c0_i32, %arg1, %c0_i32_0 : i32, i32, i32, i32
  }
}

</mosaic_0001>

<llo_original>
// kernel: tpu_custom_call.1
$region0: #{tpu_custom_call.1}
  #allocation0 [shape = 'u32[]', space=smem, size = 0x4, offset = 0x4, fixed_abs, tag = 'smem constant byte address 0x4 - core index']
  #allocation1 [shape = 'u32[144,128]{1,0:T(1,128)}', space=vmem, size = 0x12000, scoped, tag = 'internal scratch']
  %s0 = inlined_call_operand.vmem [shape: f32[2,8,16,8], index: 0, kind: input, shape index: {}]
  %s1 = inlined_call_operand.vmem [shape: f32[2,8,8,16], index: 1, kind: input, shape index: {}]
  %s2 = inlined_call_operand.vmem [shape: f32[2,8,16,8], index: 2, kind: input, shape index: {}]
  %s3 = inlined_call_operand.vmem [shape: f32[1,16,16], index: 3, kind: input, shape index: {}]
  %s4 = inlined_call_operand.vmem [shape: f32[2,1,16], index: 4, kind: input, shape index: {}]
  %s5 = inlined_call_operand.hbm [shape: f32[2,16,64], index: 5, kind: output, shape index: {0}]
  %s6 = inlined_call_operand.hbm [shape: f32[2,8,16,16], index: 6, kind: output, shape index: {1}]
  %7 = xla_tuple %s5, %s6
  %s8 = sld [smem:[#allocation0]]
  $region61: #{tpu_custom_call.1} parent=0
    _
  %s10 = ssub.s32 1, %s8
  %s11 = scalar_select 0, %s10, %s8
  $region1: #{tpu_custom_call.1} parent=0
    #allocation2 [shape = 'u8[16384]{0}', space=vmem, size = 0x4000, scoped, tag = 'output window, operand 0']
    #allocation3 [shape = 's32[2]{0}', space=sflag, size = 0x8, scoped, tag = 'scoped memory for tpu_custom_call.1']
    #allocation4 [shape = 'u8[131072]{0}', space=vmem, size = 0x20000, scoped, tag = 'output window, operand 1']
    #allocation5 [shape = 's32[2]{0}', space=sflag, size = 0x8, scoped, tag = 'scoped memory for tpu_custom_call.1']
    %12 = vsyncpa [#allocation3], 0
    %s13 = scalar_lea.sflag [#allocation3], 1
    %14 = vsyncpa %s13, 0
    %15 = vsyncpa [#allocation5], 0
    %s16 = scalar_lea.sflag [#allocation5], 1
    %17 = vsyncpa %s16, 0
    loop: start=0, step=1, limit=4
    $region2: #{tpu_custom_call.1} parent=1 // loop_pre_header
      _
    $region3: #{tpu_custom_call.1} parent=1 // loop_header
      %s19 = sphi 0, %s23
      %p20 = scmp.ge.s32.totalorder %s19, 4
      %s26 = sphi 0, %s38
      %s27 = sphi 0, %s34
      %s28 = sphi 0, %s26
      %s29 = sphi 0, %s27
      %s30 = sphi 0, %s28
      %s31 = sphi 0, %s29
      %s43 = sphi 0, %s45
      %s46 = sphi 0, %s43
      %s47 = sphi 0, %s46
      %s63 = sphi 0, %s47
      %s69 = sphi 0, %s71
      %s72 = sphi 0, %s69
      %s73 = sphi 0, %s72
      %s89 = sphi 0, %s73
      %s95 = sphi 0, %s97
      %s98 = sphi 0, %s95
      %s99 = sphi 0, %s98
      %s115 = sphi 0, %s99
      %s121 = sphi 0, %s123
      %s124 = sphi 0, %s121
      %s125 = sphi 0, %s124
      %s141 = sphi 0, %s125
      %s147 = sphi 0, %s149
      %s150 = sphi 0, %s147
      %s151 = sphi 0, %s150
      %s167 = sphi 0, %s151
      %s175 = sphi 0, %s177
      %s178 = sphi 0, %s175
      %s179 = sphi 0, %s178
      %s195 = sphi 0, %s179
      %s203 = sphi 0, %s205
      %s206 = sphi 0, %s203
      %s207 = sphi 0, %s206
      %s223 = sphi 0, %s207
    $region4: #{tpu_custom_call.1} parent=1 // loop_header_branch
      %22 = sbr.rel (%p20) target = $region8
    $region5: #{tpu_custom_call.1} parent=1 // loop_body
      %s24 = ssub.s32 %s19, 1
      %s25 = ssub.s32 %s19, 2
      %s32 = sadd.s32 1, %s27
      %p33 = scmp.ge.s32.totalorder %s32, 1
      %s34 = scalar_select %p33, 0, %s32
      %s35 = sadd.s32 1, %s26
      %s36 = scalar_select %p33, %s35, %s26
      %p37 = scmp.ge.s32.totalorder %s36, 2
      %s38 = scalar_select %p37, 0, %s36
      %s39 = ssub.s32 %s26, %s38
      %s40 = ssub.s32 %s27, %s34
      %s41 = sor.u32 %s39, %s40
      %p42 = scmp.eq.s32.totalorder %s41, 0
      %s44 = sadd.s32 %s43, 1
      %s45 = scalar_select %p42, %s43, %s44
      %p48 = pneg %p42
      %p49 = scmp.eq.s32.totalorder %s19, 1
      %p50 = por %p48, %p49
      %p51 = scmp.ne.s32.totalorder %s43, %s46
      %p52 = scmp.eq.s32.totalorder %s19, 0
      %p53 = por %p51, %p52
      %p54 = scmp.ne.s32.totalorder %s43, %s46
      %p55 = scmp.eq.s32.totalorder %s24, 1
      %p56 = por %p54, %p55
      %p57 = scmp.ne.s32.totalorder %s46, %s47
      %p58 = scmp.eq.s32.totalorder %s24, 0
      %p59 = por %p57, %p58
      %p60 = scmp.ne.s32.totalorder %s46, %s47
      %p61 = scmp.eq.s32.totalorder %s25, 1
      %p62 = por %p60, %p61
      %p64 = scmp.ne.s32.totalorder %s47, %s63
      %p65 = scmp.eq.s32.totalorder %s25, 0
      %p66 = por %p64, %p65
      %s67 = ssub.s32 %s26, %s38
      %p68 = scmp.eq.s32.totalorder %s67, 0
      %s70 = sadd.s32 %s69, 1
      %s71 = scalar_select %p68, %s69, %s70
      %p74 = pneg %p68
      %p75 = scmp.eq.s32.totalorder %s19, 1
      %p76 = por %p74, %p75
      %p77 = scmp.ne.s32.totalorder %s69, %s72
      %p78 = scmp.eq.s32.totalorder %s19, 0
      %p79 = por %p77, %p78
      %p80 = scmp.ne.s32.totalorder %s69, %s72
      %p81 = scmp.eq.s32.totalorder %s24, 1
      %p82 = por %p80, %p81
      %p83 = scmp.ne.s32.totalorder %s72, %s73
      %p84 = scmp.eq.s32.totalorder %s24, 0
      %p85 = por %p83, %p84
      %p86 = scmp.ne.s32.totalorder %s72, %s73
      %p87 = scmp.eq.s32.totalorder %s25, 1
      %p88 = por %p86, %p87
      %p90 = scmp.ne.s32.totalorder %s73, %s89
      %p91 = scmp.eq.s32.totalorder %s25, 0
      %p92 = por %p90, %p91
      %s93 = ssub.s32 %s26, %s38
      %p94 = scmp.eq.s32.totalorder %s93, 0
      %s96 = sadd.s32 %s95, 1
      %s97 = scalar_select %p94, %s95, %s96
      %p100 = pneg %p94
      %p101 = scmp.eq.s32.totalorder %s19, 1
      %p102 = por %p100, %p101
      %p103 = scmp.ne.s32.totalorder %s95, %s98
      %p104 = scmp.eq.s32.totalorder %s19, 0
      %p105 = por %p103, %p104
      %p106 = scmp.ne.s32.totalorder %s95, %s98
      %p107 = scmp.eq.s32.totalorder %s24, 1
      %p108 = por %p106, %p107
      %p109 = scmp.ne.s32.totalorder %s98, %s99
      %p110 = scmp.eq.s32.totalorder %s24, 0
      %p111 = por %p109, %p110
      %p112 = scmp.ne.s32.totalorder %s98, %s99
      %p113 = scmp.eq.s32.totalorder %s25, 1
      %p114 = por %p112, %p113
      %p116 = scmp.ne.s32.totalorder %s99, %s115
      %p117 = scmp.eq.s32.totalorder %s25, 0
      %p118 = por %p116, %p117
      %s119 = ssub.s32 %s27, %s34
      %p120 = scmp.eq.s32.totalorder %s119, 0
      %s122 = sadd.s32 %s121, 1
      %s123 = scalar_select %p120, %s121, %s122
      %p126 = pneg %p120
      %p127 = scmp.eq.s32.totalorder %s19, 1
      %p128 = por %p126, %p127
      %p129 = scmp.ne.s32.totalorder %s121, %s124
      %p130 = scmp.eq.s32.totalorder %s19, 0
      %p131 = por %p129, %p130
      %p132 = scmp.ne.s32.totalorder %s121, %s124
      %p133 = scmp.eq.s32.totalorder %s24, 1
      %p134 = por %p132, %p133
      %p135 = scmp.ne.s32.totalorder %s124, %s125
      %p136 = scmp.eq.s32.totalorder %s24, 0
      %p137 = por %p135, %p136
      %p138 = scmp.ne.s32.totalorder %s124, %s125
      %p139 = scmp.eq.s32.totalorder %s25, 1
      %p140 = por %p138, %p139
      %p142 = scmp.ne.s32.totalorder %s125, %s141
      %p143 = scmp.eq.s32.totalorder %s25, 0
      %p144 = por %p142, %p143
      %s145 = ssub.s32 %s26, %s38
      %p146 = scmp.eq.s32.totalorder %s145, 0
      %s148 = sadd.s32 %s147, 1
      %s149 = scalar_select %p146, %s147, %s148
      %p152 = pneg %p146
      %p153 = scmp.eq.s32.totalorder %s19, 1
      %p154 = por %p152, %p153
      %p155 = scmp.ne.s32.totalorder %s147, %s150
      %p156 = scmp.eq.s32.totalorder %s19, 0
      %p157 = por %p155, %p156
      %p158 = scmp.ne.s32.totalorder %s147, %s150
      %p159 = scmp.eq.s32.totalorder %s24, 1
      %p160 = por %p158, %p159
      %p161 = scmp.ne.s32.totalorder %s150, %s151
      %p162 = scmp.eq.s32.totalorder %s24, 0
      %p163 = por %p161, %p162
      %p164 = scmp.ne.s32.totalorder %s150, %s151
      %p165 = scmp.eq.s32.totalorder %s25, 1
      %p166 = por %p164, %p165
      %p168 = scmp.ne.s32.totalorder %s151, %s167
      %p169 = scmp.eq.s32.totalorder %s25, 0
      %p170 = por %p168, %p169
      %s171 = ssub.s32 %s26, %s38
      %s172 = ssub.s32 %s27, %s34
      %s173 = sor.u32 %s171, %s172
      %p174 = scmp.eq.s32.totalorder %s173, 0
      %s176 = sadd.s32 %s175, 1
      %s177 = scalar_select %p174, %s175, %s176
      %p180 = pneg %p174
      %p181 = scmp.eq.s32.totalorder %s19, 1
      %p182 = por %p180, %p181
      %p183 = scmp.ne.s32.totalorder %s175, %s178
      %p184 = scmp.eq.s32.totalorder %s19, 0
      %p185 = por %p183, %p184
      %p186 = scmp.ne.s32.totalorder %s175, %s178
      %p187 = scmp.eq.s32.totalorder %s24, 1
      %p188 = por %p186, %p187
      %p189 = scmp.ne.s32.totalorder %s178, %s179
      %p190 = scmp.eq.s32.totalorder %s24, 0
      %p191 = por %p189, %p190
      %p192 = scmp.ne.s32.totalorder %s178, %s179
      %p193 = scmp.eq.s32.totalorder %s25, 1
      %p194 = por %p192, %p193
      %p196 = scmp.ne.s32.totalorder %s179, %s195
      %p197 = scmp.eq.s32.totalorder %s25, 0
      %p198 = por %p196, %p197
      %s199 = ssub.s32 %s26, %s38
      %s200 = ssub.s32 %s27, %s34
      %s201 = sor.u32 %s199, %s200
      %p202 = scmp.eq.s32.totalorder %s201, 0
      %s204 = sadd.s32 %s203, 1
      %s205 = scalar_select %p202, %s203, %s204
      %p208 = pneg %p202
      %p209 = scmp.eq.s32.totalorder %s19, 1
      %p210 = por %p208, %p209
      %p211 = scmp.ne.s32.totalorder %s203, %s206
      %p212 = scmp.eq.s32.totalorder %s19, 0
      %p213 = por %p211, %p212
      %p214 = scmp.ne.s32.totalorder %s203, %s206
      %p215 = scmp.eq.s32.totalorder %s24, 1
      %p216 = por %p214, %p215
      %p217 = scmp.ne.s32.totalorder %s206, %s207
      %p218 = scmp.eq.s32.totalorder %s24, 0
      %p219 = por %p217, %p218
      %p220 = scmp.ne.s32.totalorder %s206, %s207
      %p221 = scmp.eq.s32.totalorder %s25, 1
      %p222 = por %p220, %p221
      %p224 = scmp.ne.s32.totalorder %s207, %s223
      %p225 = scmp.eq.s32.totalorder %s25, 0
      %p226 = por %p224, %p225
      %p227 = scmp.le.s32.totalorder 1, %s19
      %p228 = scmp.lt.s32.totalorder %s19, 3
      %p229 = pnand %p227, %p228
      %p230 = pneg %p229
      // Predicated region
      $region9: #{tpu_custom_call.1} parent=5 // pred_check
        _
      $region10: #{tpu_custom_call.1} parent=5 // pred_check_branch
        %232 = sbr.rel (%p229) target = $region12
      $region11: #{tpu_custom_call.1} parent=5 // pred_region
        %s233 = ssub.s32 %s19, 1
        // Predicated region
        $region13: #{tpu_custom_call.1} parent=11 // pred_check
          %p234 = pneg %p137
        $region14: #{tpu_custom_call.1} parent=11 // pred_check_branch
          %236 = sbr.rel (%p234) target = $region16
        $region15: #{tpu_custom_call.1} parent=11 // pred_region
          %s237 = smul.u32 2, %s29
          %p238 = scmp.lt.s32.totalorder %s237, 1
          %s239 = scalar_select %p238, %s237, 1
          %s240 = smul.addr %s239, 8
          %s241 = scalar_lea.vmem %s3, %s240
          %s242 = smul.u32 2, %s29
        $region16: #{tpu_custom_call.1} parent=11 // pred_fallthru
          _
      $region12: #{tpu_custom_call.1} parent=5 // pred_fallthru
        _
      %p243 = scmp.lt.s32.totalorder %s19, 2
      // Predicated region
      $region17: #{tpu_custom_call.1} parent=5 // pred_check
        %p244 = pneg %p243
      $region18: #{tpu_custom_call.1} parent=5 // pred_check_branch
        %246 = sbr.rel (%p244) target = $region20
      $region19: #{tpu_custom_call.1} parent=5 // pred_region
        // Predicated region
        $region21: #{tpu_custom_call.1} parent=19 // pred_check
          %p247 = pneg %p53
        $region22: #{tpu_custom_call.1} parent=19 // pred_check_branch
          %249 = sbr.rel (%p247) target = $region24
        $region23: #{tpu_custom_call.1} parent=19 // pred_region
          %s250 = smul.u32 2, %s27
          %p251 = scmp.lt.s32.totalorder %s26, 1
          %s252 = scalar_select %p251, %s26, 1
          %p253 = scmp.lt.s32.totalorder %s250, 1
          %s254 = scalar_select %p253, %s250, 1
          %s255 = smul.addr %s252, 16
          %s256 = sadd.s32 %s254, %s255
          %s257 = smul.addr %s256, 8
          %s258 = scalar_lea.vmem %s0, %s257
          %s259 = smul.u32 2, %s27
        $region24: #{tpu_custom_call.1} parent=19 // pred_fallthru
          _
        // Predicated region
        $region25: #{tpu_custom_call.1} parent=19 // pred_check
          %p260 = pneg %p79
        $region26: #{tpu_custom_call.1} parent=19 // pred_check_branch
          %262 = sbr.rel (%p260) target = $region28
        $region27: #{tpu_custom_call.1} parent=19 // pred_region
          %p263 = scmp.lt.s32.totalorder %s26, 1
          %s264 = scalar_select %p263, %s26, 1
          %s265 = smul.addr %s264, 8
          %s266 = smul.addr %s265, 8
          %s267 = scalar_lea.vmem %s1, %s266
        $region28: #{tpu_custom_call.1} parent=19 // pred_fallthru
          _
        // Predicated region
        $region29: #{tpu_custom_call.1} parent=19 // pred_check
          %p268 = pneg %p105
        $region30: #{tpu_custom_call.1} parent=19 // pred_check_branch
          %270 = sbr.rel (%p268) target = $region32
        $region31: #{tpu_custom_call.1} parent=19 // pred_region
          %p271 = scmp.lt.s32.totalorder %s26, 1
          %s272 = scalar_select %p271, %s26, 1
          %s273 = smul.addr %s272, 16
          %s274 = smul.addr %s273, 8
          %s275 = scalar_lea.vmem %s2, %s274
        $region32: #{tpu_custom_call.1} parent=19 // pred_fallthru
          _
        // Predicated region
        $region33: #{tpu_custom_call.1} parent=19 // pred_check
          %p276 = pneg %p157
        $region34: #{tpu_custom_call.1} parent=19 // pred_check_branch
          %278 = sbr.rel (%p276) target = $region36
        $region35: #{tpu_custom_call.1} parent=19 // pred_region
          %p279 = scmp.lt.s32.totalorder %s26, 1
          %s280 = scalar_select %p279, %s26, 1
          %s281 = scalar_lea.vmem %s4, %s280
        $region36: #{tpu_custom_call.1} parent=19 // pred_fallthru
          _
      $region20: #{tpu_custom_call.1} parent=5 // pred_fallthru
        _
      %p282 = scmp.le.s32.totalorder 1, %s19
      %p283 = scmp.lt.s32.totalorder %s19, 3
      %p284 = pnand %p282, %p283
      %p285 = pneg %p284
      // Predicated region
      $region37: #{tpu_custom_call.1} parent=5 // pred_check
        _
      $region38: #{tpu_custom_call.1} parent=5 // pred_check_branch
        %287 = sbr.rel (%p284) target = $region40
      $region39: #{tpu_custom_call.1} parent=5 // pred_region
        %s288 = ssub.s32 %s19, 1
        %s289 = smul.u32 2, %s29
        %p290 = scmp.lt.s32.totalorder %s28, 1
        %s291 = scalar_select %p290, %s28, 1
        %p292 = scmp.lt.s32.totalorder %s289, 1
        %s293 = scalar_select %p292, %s289, 1
        %s294 = smul.addr %s291, 16
        %s295 = sadd.s32 %s293, %s294
        %s296 = smul.addr %s295, 8
        %s297 = scalar_lea.vmem %s0, %s296
        %p298 = pneg %p59
        %p299 = pneg %p56
        %p300 = scmp.lt.s32.totalorder %s28, 1
        %s301 = scalar_select %p300, %s28, 1
        %s302 = smul.addr %s301, 8
        %s303 = smul.addr %s302, 8
        %s304 = scalar_lea.vmem %s1, %s303
        %p305 = pneg %p85
        %p306 = pneg %p82
        %p307 = scmp.lt.s32.totalorder %s28, 1
        %s308 = scalar_select %p307, %s28, 1
        %s309 = smul.addr %s308, 16
        %s310 = smul.addr %s309, 8
        %s311 = scalar_lea.vmem %s2, %s310
        %p312 = pneg %p111
        %p313 = pneg %p108
        %s314 = smul.u32 2, %s29
        %p315 = scmp.lt.s32.totalorder %s314, 1
        %s316 = scalar_select %p315, %s314, 1
        %s317 = smul.addr %s316, 8
        %s318 = scalar_lea.vmem %s3, %s317
        %p319 = pneg %p137
        %p320 = pneg %p134
        %p321 = scmp.lt.s32.totalorder %s28, 1
        %s322 = scalar_select %p321, %s28, 1
        %s323 = scalar_lea.vmem %s4, %s322
        %p324 = pneg %p163
        %p325 = pneg %p160
        %p326 = pneg %p191
        %p327 = pneg %p188
        %s328 = sand.u32 %s178, 1
        %s329 = scalar_lea.sflag [#allocation3], %s328
        %s330 = sand.u32 %s178, 1
        %s331 = smul.addr %s330, 16
        %s332 = scalar_lea.vmem [#allocation2], %s331
        %p333 = pneg %p219
        %p334 = pneg %p216
        %s335 = sand.u32 %s206, 1
        %s336 = scalar_lea.sflag [#allocation5], %s335
        %s337 = sand.u32 %s206, 1
        %s338 = smul.addr %s337, 128
        %s339 = scalar_lea.vmem [#allocation4], %s338
        %s340 = smul.u32 2, %s29
        %p341 = scmp.lt.s32.totalorder %s28, 1
        %s342 = scalar_select %p341, %s28, 1
        %p343 = scmp.lt.s32.totalorder %s340, 1
        %s344 = scalar_select %p343, %s340, 1
        %s345 = smul.addr %s342, 16
        %s346 = sadd.s32 %s344, %s345
        %s347 = smul.addr %s346, 8
        %s348 = scalar_lea.vmem %s0, %s347
        %s349 = smul.u32 2, %s29
        %p350 = scmp.lt.s32.totalorder %s28, 1
        %s351 = scalar_select %p350, %s28, 1
        %s352 = smul.addr %s351, 8
        %s353 = smul.addr %s352, 8
        %s354 = scalar_lea.vmem %s1, %s353
        %p355 = scmp.lt.s32.totalorder %s28, 1
        %s356 = scalar_select %p355, %s28, 1
        %s357 = smul.addr %s356, 16
        %s358 = smul.addr %s357, 8
        %s359 = scalar_lea.vmem %s2, %s358
        %s360 = smul.u32 2, %s29
        %p361 = scmp.lt.s32.totalorder %s360, 1
        %s362 = scalar_select %p361, %s360, 1
        %s363 = smul.addr %s362, 8
        %s364 = scalar_lea.vmem %s3, %s363
        %s365 = smul.u32 2, %s29
        %p366 = scmp.lt.s32.totalorder %s28, 1
        %s367 = scalar_select %p366, %s28, 1
        %s368 = scalar_lea.vmem %s4, %s367
        %s369 = smul.u32 2, %s29
        %s370 = smul.u32 2, %s29
        %v371 = vld [vmem:[%s348] sm:$0xff]
        %v372 = vld [vmem:[%s348 + $0x8] sm:$0xff]
        %v373 = vld [vmem:[%s348 + $0x10] sm:$0xff]
        %v374 = vld [vmem:[%s348 + $0x18] sm:$0xff]
        %v375 = vld [vmem:[%s348 + $0x20] sm:$0xff]
        %v376 = vld [vmem:[%s348 + $0x28] sm:$0xff]
        %v377 = vld [vmem:[%s348 + $0x30] sm:$0xff]
        %v378 = vld [vmem:[%s348 + $0x38] sm:$0xff]
        %v379 = vld [vmem:[%s348 + $0x40] sm:$0xff]
        %v380 = vld [vmem:[%s348 + $0x48] sm:$0xff]
        %v381 = vld [vmem:[%s348 + $0x50] sm:$0xff]
        %v382 = vld [vmem:[%s348 + $0x58] sm:$0xff]
        %v383 = vld [vmem:[%s348 + $0x60] sm:$0xff]
        %v384 = vld [vmem:[%s348 + $0x68] sm:$0xff]
        %v385 = vld [vmem:[%s348 + $0x70] sm:$0xff]
        %v386 = vld [vmem:[%s348 + $0x78] sm:$0xff]
        %v387 = vmul.f32 %v371, 0.35355338
        %v388 = vmul.f32 %v372, 0.35355338
        %v389 = vmul.f32 %v373, 0.35355338
        %v390 = vmul.f32 %v374, 0.35355338
        %v391 = vmul.f32 %v375, 0.35355338
        %v392 = vmul.f32 %v376, 0.35355338
        %v393 = vmul.f32 %v377, 0.35355338
        %v394 = vmul.f32 %v378, 0.35355338
        %v395 = vmul.f32 %v379, 0.35355338
        %v396 = vmul.f32 %v380, 0.35355338
        %v397 = vmul.f32 %v381, 0.35355338
        %v398 = vmul.f32 %v382, 0.35355338
        %v399 = vmul.f32 %v383, 0.35355338
        %v400 = vmul.f32 %v384, 0.35355338
        %v401 = vmul.f32 %v385, 0.35355338
        %v402 = vmul.f32 %v386, 0.35355338
        %v403 = vld [vmem:[%s354] sm:$0xff]
        %v404 = vld [vmem:[%s354 + $0x8] sm:$0xff]
        %v405 = vld [vmem:[%s354 + $0x10] sm:$0xff]
        %v406 = vld [vmem:[%s354 + $0x18] sm:$0xff]
        %v407 = vld [vmem:[%s354 + $0x20] sm:$0xff]
        %v408 = vld [vmem:[%s354 + $0x28] sm:$0xff]
        %v409 = vld [vmem:[%s354 + $0x30] sm:$0xff]
        %v410 = vld [vmem:[%s354 + $0x38] sm:$0xff]
        %v411 = vld [vmem:[%s359] sm:$0xff]
        %v412 = vld [vmem:[%s359 + $0x8] sm:$0xff]
        %v413 = vld [vmem:[%s359 + $0x10] sm:$0xff]
        %v414 = vld [vmem:[%s359 + $0x18] sm:$0xff]
        %v415 = vld [vmem:[%s359 + $0x20] sm:$0xff]
        %v416 = vld [vmem:[%s359 + $0x28] sm:$0xff]
        %v417 = vld [vmem:[%s359 + $0x30] sm:$0xff]
        %v418 = vld [vmem:[%s359 + $0x38] sm:$0xff]
        %v419 = vld [vmem:[%s359 + $0x40] sm:$0xff]
        %v420 = vld [vmem:[%s359 + $0x48] sm:$0xff]
        %v421 = vld [vmem:[%s359 + $0x50] sm:$0xff]
        %v422 = vld [vmem:[%s359 + $0x58] sm:$0xff]
        %v423 = vld [vmem:[%s359 + $0x60] sm:$0xff]
        %v424 = vld [vmem:[%s359 + $0x68] sm:$0xff]
        %v425 = vld [vmem:[%s359 + $0x70] sm:$0xff]
        %v426 = vld [vmem:[%s359 + $0x78] sm:$0xff]
        %v427 = vld [vmem:[%s364] sm:$0xff]
        %v428 = vld [vmem:[%s364 + $0x8] sm:$0xff]
        %vm429 = vcmask 64512
        %v431 = vsel %vm429, %v387, 0
        %v434 = vsel %vm429, %v388, 0
        %436 = vmatprep.subr.mxu0 0.0
        %437 = vmatpush1.msra.mxu0 %v403
        %438 = vmatprep.subr.mxu0 0.0
        %439 = vmatpush1.msra.mxu0 0.0
        %440 = vmatprep.subr.mxu0 0.0
        %441 = vmatpush1.msra.mxu0 0.0
        %442 = vmatprep.subr.mxu0 0.0
        %443 = vmatpush1.msra.mxu0 0.0
        %444 = vmatprep.subr.mxu0 0.0
        %445 = vmatpush1.msra.mxu0 0.0
        %446 = vmatprep.subr.mxu0 0.0
        %447 = vmatpush1.msra.mxu0 0.0
        %448 = vmatprep.subr.mxu0 0.0
        %449 = vmatpush1.msra.mxu0 0.0
        %450 = vmatprep.subr.mxu0 0.0
        %451 = vmatpush1.msra.mxu0 0.0
        %452 = vmatprep.subr.mxu0 0.0
        %453 = vmatpush1.msra.mxu0 0.0
        %454 = vmatprep.subr.mxu0 0.0
        %455 = vmatpush1.msra.mxu0 0.0
        %456 = vmatprep.subr.mxu0 0.0
        %457 = vmatpush1.msra.mxu0 0.0
        %458 = vmatprep.subr.mxu0 0.0
        %459 = vmatpush1.msra.mxu0 0.0
        %460 = vmatprep.subr.mxu0 0.0
        %461 = vmatpush1.msra.mxu0 0.0
        %462 = vmatprep.subr.mxu0 0.0
        %463 = vmatpush1.msra.mxu0 0.0
        %464 = vmatprep.subr.mxu0 0.0
        %465 = vmatpush1.msra.mxu0 0.0
        %466 = vmatprep.subr.mxu0 0.0
        %467 = vmatpush1.msra.mxu0 0.0
        %468 = vmatprep.subr.mxu0 0.0
        %469 = vmatpush1.msra.mxu0 0.0
        %470 = vmatprep.subr.mxu0 0.0
        %471 = vmatpush1.msra.mxu0 0.0
        %472 = vmatprep.subr.mxu0 0.0
        %473 = vmatpush1.msra.mxu0 0.0
        %474 = vmatprep.subr.mxu0 0.0
        %475 = vmatpush1.msra.mxu0 0.0
        %476 = vmatprep.subr.mxu0 0.0
        %477 = vmatpush1.msra.mxu0 0.0
        %478 = vmatprep.subr.mxu0 0.0
        %479 = vmatpush1.msra.mxu0 0.0
        %480 = vmatprep.subr.mxu0 0.0
        %481 = vmatpush1.msra.mxu0 0.0
        %482 = vmatprep.subr.mxu0 0.0
        %483 = vmatpush1.msra.mxu0 0.0
        %484 = vmatprep.subr.mxu0 0.0
        %485 = vmatpush1.msra.mxu0 0.0
        %486 = vmatprep.subr.mxu0 0.0
        %487 = vmatpush1.msra.mxu0 0.0
        %488 = vmatprep.subr.mxu0 0.0
        %489 = vmatpush1.msra.mxu0 0.0
        %490 = vmatprep.subr.mxu0 0.0
        %491 = vmatpush1.msra.mxu0 0.0
        %492 = vmatprep.subr.mxu0 0.0
        %493 = vmatpush1.msra.mxu0 0.0
        %494 = vmatprep.subr.mxu0 0.0
        %495 = vmatpush1.msra.mxu0 0.0
        %496 = vmatprep.subr.mxu0 0.0
        %497 = vmatpush1.msra.mxu0 0.0
        %498 = vmatprep.subr.mxu0 0.0
        %499 = vmatpush1.msra.mxu0 0.0
        %500 = vmatprep.mubr.f32.mxu0 0.0
        %501 = vmatmul.mubr.f32.gmra.mrb[0].mxu0 %v431
        %v502 = vpop.f32.mrb[0].mxu0
        %v503 = vadd.f32 %v427, %v502
        %v504 = vpop.f32.mrb[0].mxu0
        %505 = vmatprep.mubr.f32.mxu0 0.0
        %506 = vmatmul.mubr.f32.gmra.mrb[0].mxu0 %v434
        %v507 = vpop.f32.mrb[0].mxu0
        %v508 = vadd.f32 %v428, %v507
        %v509 = vpop.f32.mrb[0].mxu0
        %510 = vdwg.mxu0
        %v512 = vsel %vm429, %v389, 0
        %v515 = vsel %vm429, %v390, 0
        %517 = vmatprep.subr.mxu0 0.0
        %518 = vmatpush1.msra.mxu0 %v404
        %519 = vmatprep.subr.mxu0 0.0
        %520 = vmatpush1.msra.mxu0 0.0
        %521 = vmatprep.subr.mxu0 0.0
        %522 = vmatpush1.msra.mxu0 0.0
        %523 = vmatprep.subr.mxu0 0.0
        %524 = vmatpush1.msra.mxu0 0.0
        %525 = vmatprep.subr.mxu0 0.0
        %526 = vmatpush1.msra.mxu0 0.0
        %527 = vmatprep.subr.mxu0 0.0
        %528 = vmatpush1.msra.mxu0 0.0
        %529 = vmatprep.subr.mxu0 0.0
        %530 = vmatpush1.msra.mxu0 0.0
        %531 = vmatprep.subr.mxu0 0.0
        %532 = vmatpush1.msra.mxu0 0.0
        %533 = vmatprep.subr.mxu0 0.0
        %534 = vmatpush1.msra.mxu0 0.0
        %535 = vmatprep.subr.mxu0 0.0
        %536 = vmatpush1.msra.mxu0 0.0
        %537 = vmatprep.subr.mxu0 0.0
        %538 = vmatpush1.msra.mxu0 0.0
        %539 = vmatprep.subr.mxu0 0.0
        %540 = vmatpush1.msra.mxu0 0.0
        %541 = vmatprep.subr.mxu0 0.0
        %542 = vmatpush1.msra.mxu0 0.0
        %543 = vmatprep.subr.mxu0 0.0
        %544 = vmatpush1.msra.mxu0 0.0
        %545 = vmatprep.subr.mxu0 0.0
        %546 = vmatpush1.msra.mxu0 0.0
        %547 = vmatprep.subr.mxu0 0.0
        %548 = vmatpush1.msra.mxu0 0.0
        %549 = vmatprep.subr.mxu0 0.0
        %550 = vmatpush1.msra.mxu0 0.0
        %551 = vmatprep.subr.mxu0 0.0
        %552 = vmatpush1.msra.mxu0 0.0
        %553 = vmatprep.subr.mxu0 0.0
        %554 = vmatpush1.msra.mxu0 0.0
        %555 = vmatprep.subr.mxu0 0.0
        %556 = vmatpush1.msra.mxu0 0.0
        %557 = vmatprep.subr.mxu0 0.0
        %558 = vmatpush1.msra.mxu0 0.0
        %559 = vmatprep.subr.mxu0 0.0
        %560 = vmatpush1.msra.mxu0 0.0
        %561 = vmatprep.subr.mxu0 0.0
        %562 = vmatpush1.msra.mxu0 0.0
        %563 = vmatprep.subr.mxu0 0.0
        %564 = vmatpush1.msra.mxu0 0.0
        %565 = vmatprep.subr.mxu0 0.0
        %566 = vmatpush1.msra.mxu0 0.0
        %567 = vmatprep.subr.mxu0 0.0
        %568 = vmatpush1.msra.mxu0 0.0
        %569 = vmatprep.subr.mxu0 0.0
        %570 = vmatpush1.msra.mxu0 0.0
        %571 = vmatprep.subr.mxu0 0.0
        %572 = vmatpush1.msra.mxu0 0.0
        %573 = vmatprep.subr.mxu0 0.0
        %574 = vmatpush1.msra.mxu0 0.0
        %575 = vmatprep.subr.mxu0 0.0
        %576 = vmatpush1.msra.mxu0 0.0
        %577 = vmatprep.subr.mxu0 0.0
        %578 = vmatpush1.msra.mxu0 0.0
        %579 = vmatprep.subr.mxu0 0.0
        %580 = vmatpush1.msra.mxu0 0.0
        %581 = vmatprep.mubr.f32.mxu0 0.0
        %582 = vmatmul.mubr.f32.gmra.mrb[0].mxu0 %v512
        %v583 = vpop.f32.mrb[0].mxu0
        %v584 = vadd.f32 %v427, %v583
        %v585 = vpop.f32.mrb[0].mxu0
        %586 = vmatprep.mubr.f32.mxu0 0.0
        %587 = vmatmul.mubr.f32.gmra.mrb[0].mxu0 %v515
        %v588 = vpop.f32.mrb[0].mxu0
        %v589 = vadd.f32 %v428, %v588
        %v590 = vpop.f32.mrb[0].mxu0
        %591 = vdwg.mxu0
        %v593 = vsel %vm429, %v391, 0
        %v596 = vsel %vm429, %v392, 0
        %598 = vmatprep.subr.mxu0 0.0
        %599 = vmatpush1.msra.mxu0 %v405
        %600 = vmatprep.subr.mxu0 0.0
        %601 = vmatpush1.msra.mxu0 0.0
        %602 = vmatprep.subr.mxu0 0.0
        %603 = vmatpush1.msra.mxu0 0.0
        %604 = vmatprep.subr.mxu0 0.0
        %605 = vmatpush1.msra.mxu0 0.0
        %606 = vmatprep.subr.mxu0 0.0
        %607 = vmatpush1.msra.mxu0 0.0
        %608 = vmatprep.subr.mxu0 0.0
        %609 = vmatpush1.msra.mxu0 0.0
        %610 = vmatprep.subr.mxu0 0.0
        %611 = vmatpush1.msra.mxu0 0.0
        %612 = vmatprep.subr.mxu0 0.0
        %613 = vmatpush1.msra.mxu0 0.0
        %614 = vmatprep.subr.mxu0 0.0
        %615 = vmatpush1.msra.mxu0 0.0
        %616 = vmatprep.subr.mxu0 0.0
        %617 = vmatpush1.msra.mxu0 0.0
        %618 = vmatprep.subr.mxu0 0.0
        %619 = vmatpush1.msra.mxu0 0.0
        %620 = vmatprep.subr.mxu0 0.0
        %621 = vmatpush1.msra.mxu0 0.0
        %622 = vmatprep.subr.mxu0 0.0
        %623 = vmatpush1.msra.mxu0 0.0
        %624 = vmatprep.subr.mxu0 0.0
        %625 = vmatpush1.msra.mxu0 0.0
        %626 = vmatprep.subr.mxu0 0.0
        %627 = vmatpush1.msra.mxu0 0.0
        %628 = vmatprep.subr.mxu0 0.0
        %629 = vmatpush1.msra.mxu0 0.0
        %630 = vmatprep.subr.mxu0 0.0
        %631 = vmatpush1.msra.mxu0 0.0
        %632 = vmatprep.subr.mxu0 0.0
        %633 = vmatpush1.msra.mxu0 0.0
        %634 = vmatprep.subr.mxu0 0.0
        %635 = vmatpush1.msra.mxu0 0.0
        %636 = vmatprep.subr.mxu0 0.0
        %637 = vmatpush1.msra.mxu0 0.0
        %638 = vmatprep.subr.mxu0 0.0
        %639 = vmatpush1.msra.mxu0 0.0
        %640 = vmatprep.subr.mxu0 0.0
        %641 = vmatpush1.msra.mxu0 0.0
        %642 = vmatprep.subr.mxu0 0.0
        %643 = vmatpush1.msra.mxu0 0.0
        %644 = vmatprep.subr.mxu0 0.0
        %645 = vmatpush1.msra.mxu0 0.0
        %646 = vmatprep.subr.mxu0 0.0
        %647 = vmatpush1.msra.mxu0 0.0
        %648 = vmatprep.subr.mxu0 0.0
        %649 = vmatpush1.msra.mxu0 0.0
        %650 = vmatprep.subr.mxu0 0.0
        %651 = vmatpush1.msra.mxu0 0.0
        %652 = vmatprep.subr.mxu0 0.0
        %653 = vmatpush1.msra.mxu0 0.0
        %654 = vmatprep.subr.mxu0 0.0
        %655 = vmatpush1.msra.mxu0 0.0
        %656 = vmatprep.subr.mxu0 0.0
        %657 = vmatpush1.msra.mxu0 0.0
        %658 = vmatprep.subr.mxu0 0.0
        %659 = vmatpush1.msra.mxu0 0.0
        %660 = vmatprep.subr.mxu0 0.0
        %661 = vmatpush1.msra.mxu0 0.0
        %662 = vmatprep.mubr.f32.mxu0 0.0
        %663 = vmatmul.mubr.f32.gmra.mrb[0].mxu0 %v593
        %v664 = vpop.f32.mrb[0].mxu0
        %v665 = vadd.f32 %v427, %v664
        %v666 = vpop.f32.mrb[0].mxu0
        %667 = vmatprep.mubr.f32.mxu0 0.0
        %668 = vmatmul.mubr.f32.gmra.mrb[0].mxu0 %v596
        %v669 = vpop.f32.mrb[0].mxu0
        %v670 = vadd.f32 %v428, %v669
        %v671 = vpop.f32.mrb[0].mxu0
        %672 = vdwg.mxu0
        %v674 = vsel %vm429, %v393, 0
        %v677 = vsel %vm429, %v394, 0
        %679 = vmatprep.subr.mxu0 0.0
        %680 = vmatpush1.msra.mxu0 %v406
        %681 = vmatprep.subr.mxu0 0.0
        %682 = vmatpush1.msra.mxu0 0.0
        %683 = vmatprep.subr.mxu0 0.0
        %684 = vmatpush1.msra.mxu0 0.0
        %685 = vmatprep.subr.mxu0 0.0
        %686 = vmatpush1.msra.mxu0 0.0
        %687 = vmatprep.subr.mxu0 0.0
        %688 = vmatpush1.msra.mxu0 0.0
        %689 = vmatprep.subr.mxu0 0.0
        %690 = vmatpush1.msra.mxu0 0.0
        %691 = vmatprep.subr.mxu0 0.0
        %692 = vmatpush1.msra.mxu0 0.0
        %693 = vmatprep.subr.mxu0 0.0
        %694 = vmatpush1.msra.mxu0 0.0
        %695 = vmatprep.subr.mxu0 0.0
        %696 = vmatpush1.msra.mxu0 0.0
        %697 = vmatprep.subr.mxu0 0.0
        %698 = vmatpush1.msra.mxu0 0.0
        %699 = vmatprep.subr.mxu0 0.0
        %700 = vmatpush1.msra.mxu0 0.0
        %701 = vmatprep.subr.mxu0 0.0
        %702 = vmatpush1.msra.mxu0 0.0
        %703 = vmatprep.subr.mxu0 0.0
        %704 = vmatpush1.msra.mxu0 0.0
        %705 = vmatprep.subr.mxu0 0.0
        %706 = vmatpush1.msra.mxu0 0.0
        %707 = vmatprep.subr.mxu0 0.0
        %708 = vmatpush1.msra.mxu0 0.0
        %709 = vmatprep.subr.mxu0 0.0
        %710 = vmatpush1.msra.mxu0 0.0
        %711 = vmatprep.subr.mxu0 0.0
        %712 = vmatpush1.msra.mxu0 0.0
        %713 = vmatprep.subr.mxu0 0.0
        %714 = vmatpush1.msra.mxu0 0.0
        %715 = vmatprep.subr.mxu0 0.0
        %716 = vmatpush1.msra.mxu0 0.0
        %717 = vmatprep.subr.mxu0 0.0
        %718 = vmatpush1.msra.mxu0 0.0
        %719 = vmatprep.subr.mxu0 0.0
        %720 = vmatpush1.msra.mxu0 0.0
        %721 = vmatprep.subr.mxu0 0.0
        %722 = vmatpush1.msra.mxu0 0.0
        %723 = vmatprep.subr.mxu0 0.0
        %724 = vmatpush1.msra.mxu0 0.0
        %725 = vmatprep.subr.mxu0 0.0
        %726 = vmatpush1.msra.mxu0 0.0
        %727 = vmatprep.subr.mxu0 0.0
        %728 = vmatpush1.msra.mxu0 0.0
        %729 = vmatprep.subr.mxu0 0.0
        %730 = vmatpush1.msra.mxu0 0.0
        %731 = vmatprep.subr.mxu0 0.0
        %732 = vmatpush1.msra.mxu0 0.0
        %733 = vmatprep.subr.mxu0 0.0
        %734 = vmatpush1.msra.mxu0 0.0
        %735 = vmatprep.subr.mxu0 0.0
        %736 = vmatpush1.msra.mxu0 0.0
        %737 = vmatprep.subr.mxu0 0.0
        %738 = vmatpush1.msra.mxu0 0.0
        %739 = vmatprep.subr.mxu0 0.0
        %740 = vmatpush1.msra.mxu0 0.0
        %741 = vmatprep.subr.mxu0 0.0
        %742 = vmatpush1.msra.mxu0 0.0
        %743 = vmatprep.mubr.f32.mxu0 0.0
        %744 = vmatmul.mubr.f32.gmra.mrb[0].mxu0 %v674
        %v745 = vpop.f32.mrb[0].mxu0
        %v746 = vadd.f32 %v427, %v745
        %v747 = vpop.f32.mrb[0].mxu0
        %748 = vmatprep.mubr.f32.mxu0 0.0
        %749 = vmatmul.mubr.f32.gmra.mrb[0].mxu0 %v677
        %v750 = vpop.f32.mrb[0].mxu0
        %v751 = vadd.f32 %v428, %v750
        %v752 = vpop.f32.mrb[0].mxu0
        %753 = vdwg.mxu0
        %v755 = vsel %vm429, %v395, 0
        %v758 = vsel %vm429, %v396, 0
        %760 = vmatprep.subr.mxu0 0.0
        %761 = vmatpush1.msra.mxu0 %v407
        %762 = vmatprep.subr.mxu0 0.0
        %763 = vmatpush1.msra.mxu0 0.0
        %764 = vmatprep.subr.mxu0 0.0
        %765 = vmatpush1.msra.mxu0 0.0
        %766 = vmatprep.subr.mxu0 0.0
        %767 = vmatpush1.msra.mxu0 0.0
        %768 = vmatprep.subr.mxu0 0.0
        %769 = vmatpush1.msra.mxu0 0.0
        %770 = vmatprep.subr.mxu0 0.0
        %771 = vmatpush1.msra.mxu0 0.0
        %772 = vmatprep.subr.mxu0 0.0
        %773 = vmatpush1.msra.mxu0 0.0
        %774 = vmatprep.subr.mxu0 0.0
        %775 = vmatpush1.msra.mxu0 0.0
        %776 = vmatprep.subr.mxu0 0.0
        %777 = vmatpush1.msra.mxu0 0.0
        %778 = vmatprep.subr.mxu0 0.0
        %779 = vmatpush1.msra.mxu0 0.0
        %780 = vmatprep.subr.mxu0 0.0
        %781 = vmatpush1.msra.mxu0 0.0
        %782 = vmatprep.subr.mxu0 0.0
        %783 = vmatpush1.msra.mxu0 0.0
        %784 = vmatprep.subr.mxu0 0.0
        %785 = vmatpush1.msra.mxu0 0.0
        %786 = vmatprep.subr.mxu0 0.0
        %787 = vmatpush1.msra.mxu0 0.0
        %788 = vmatprep.subr.mxu0 0.0
        %789 = vmatpush1.msra.mxu0 0.0
        %790 = vmatprep.subr.mxu0 0.0
        %791 = vmatpush1.msra.mxu0 0.0
        %792 = vmatprep.subr.mxu0 0.0
        %793 = vmatpush1.msra.mxu0 0.0
        %794 = vmatprep.subr.mxu0 0.0
        %795 = vmatpush1.msra.mxu0 0.0
        %796 = vmatprep.subr.mxu0 0.0
        %797 = vmatpush1.msra.mxu0 0.0
        %798 = vmatprep.subr.mxu0 0.0
        %799 = vmatpush1.msra.mxu0 0.0
        %800 = vmatprep.subr.mxu0 0.0
        %801 = vmatpush1.msra.mxu0 0.0
        %802 = vmatprep.subr.mxu0 0.0
        %803 = vmatpush1.msra.mxu0 0.0
        %804 = vmatprep.subr.mxu0 0.0
        %805 = vmatpush1.msra.mxu0 0.0
        %806 = vmatprep.subr.mxu0 0.0
        %807 = vmatpush1.msra.mxu0 0.0
        %808 = vmatprep.subr.mxu0 0.0
        %809 = vmatpush1.msra.mxu0 0.0
        %810 = vmatprep.subr.mxu0 0.0
        %811 = vmatpush1.msra.mxu0 0.0
        %812 = vmatprep.subr.mxu0 0.0
        %813 = vmatpush1.msra.mxu0 0.0
        %814 = vmatprep.subr.mxu0 0.0
        %815 = vmatpush1.msra.mxu0 0.0
        %816 = vmatprep.subr.mxu0 0.0
        %817 = vmatpush1.msra.mxu0 0.0
        %818 = vmatprep.subr.mxu0 0.0
        %819 = vmatpush1.msra.mxu0 0.0
        %820 = vmatprep.subr.mxu0 0.0
        %821 = vmatpush1.msra.mxu0 0.0
        %822 = vmatprep.subr.mxu0 0.0
        %823 = vmatpush1.msra.mxu0 0.0
        %824 = vmatprep.mubr.f32.mxu0 0.0
        %825 = vmatmul.mubr.f32.gmra.mrb[0].mxu0 %v755
        %v826 = vpop.f32.mrb[0].mxu0
        %v827 = vadd.f32 %v427, %v826
        %v828 = vpop.f32.mrb[0].mxu0
        %829 = vmatprep.mubr.f32.mxu0 0.0
        %830 = vmatmul.mubr.f32.gmra.mrb[0].mxu0 %v758
        %v831 = vpop.f32.mrb[0].mxu0
        %v832 = vadd.f32 %v428, %v831
        %v833 = vpop.f32.mrb[0].mxu0
        %834 = vdwg.mxu0
        %v836 = vsel %vm429, %v397, 0
        %v839 = vsel %vm429, %v398, 0
        %841 = vmatprep.subr.mxu0 0.0
        %842 = vmatpush1.msra.mxu0 %v408
        %843 = vmatprep.subr.mxu0 0.0
        %844 = vmatpush1.msra.mxu0 0.0
        %845 = vmatprep.subr.mxu0 0.0
        %846 = vmatpush1.msra.mxu0 0.0
        %847 = vmatprep.subr.mxu0 0.0
        %848 = vmatpush1.msra.mxu0 0.0
        %849 = vmatprep.subr.mxu0 0.0
        %850 = vmatpush1.msra.mxu0 0.0
        %851 = vmatprep.subr.mxu0 0.0
        %852 = vmatpush1.msra.mxu0 0.0
        %853 = vmatprep.subr.mxu0 0.0
        %854 = vmatpush1.msra.mxu0 0.0
        %855 = vmatprep.subr.mxu0 0.0
        %856 = vmatpush1.msra.mxu0 0.0
        %857 = vmatprep.subr.mxu0 0.0
        %858 = vmatpush1.msra.mxu0 0.0
        %859 = vmatprep.subr.mxu0 0.0
        %860 = vmatpush1.msra.mxu0 0.0
        %861 = vmatprep.subr.mxu0 0.0
        %862 = vmatpush1.msra.mxu0 0.0
        %863 = vmatprep.subr.mxu0 0.0
        %864 = vmatpush1.msra.mxu0 0.0
        %865 = vmatprep.subr.mxu0 0.0
        %866 = vmatpush1.msra.mxu0 0.0
        %867 = vmatprep.subr.mxu0 0.0
        %868 = vmatpush1.msra.mxu0 0.0
        %869 = vmatprep.subr.mxu0 0.0
        %870 = vmatpush1.msra.mxu0 0.0
        %871 = vmatprep.subr.mxu0 0.0
        %872 = vmatpush1.msra.mxu0 0.0
        %873 = vmatprep.subr.mxu0 0.0
        %874 = vmatpush1.msra.mxu0 0.0
        %875 = vmatprep.subr.mxu0 0.0
        %876 = vmatpush1.msra.mxu0 0.0
        %877 = vmatprep.subr.mxu0 0.0
        %878 = vmatpush1.msra.mxu0 0.0
        %879 = vmatprep.subr.mxu0 0.0
        %880 = vmatpush1.msra.mxu0 0.0
        %881 = vmatprep.subr.mxu0 0.0
        %882 = vmatpush1.msra.mxu0 0.0
        %883 = vmatprep.subr.mxu0 0.0
        %884 = vmatpush1.msra.mxu0 0.0
        %885 = vmatprep.subr.mxu0 0.0
        %886 = vmatpush1.msra.mxu0 0.0
        %887 = vmatprep.subr.mxu0 0.0
        %888 = vmatpush1.msra.mxu0 0.0
        %889 = vmatprep.subr.mxu0 0.0
        %890 = vmatpush1.msra.mxu0 0.0
        %891 = vmatprep.subr.mxu0 0.0
        %892 = vmatpush1.msra.mxu0 0.0
        %893 = vmatprep.subr.mxu0 0.0
        %894 = vmatpush1.msra.mxu0 0.0
        %895 = vmatprep.subr.mxu0 0.0
        %896 = vmatpush1.msra.mxu0 0.0
        %897 = vmatprep.subr.mxu0 0.0
        %898 = vmatpush1.msra.mxu0 0.0
        %899 = vmatprep.subr.mxu0 0.0
        %900 = vmatpush1.msra.mxu0 0.0
        %901 = vmatprep.subr.mxu0 0.0
        %902 = vmatpush1.msra.mxu0 0.0
        %903 = vmatprep.subr.mxu0 0.0
        %904 = vmatpush1.msra.mxu0 0.0
        %905 = vmatprep.mubr.f32.mxu0 0.0
        %906 = vmatmul.mubr.f32.gmra.mrb[0].mxu0 %v836
        %v907 = vpop.f32.mrb[0].mxu0
        %v908 = vadd.f32 %v427, %v907
        %v909 = vpop.f32.mrb[0].mxu0
        %910 = vmatprep.mubr.f32.mxu0 0.0
        %911 = vmatmul.mubr.f32.gmra.mrb[0].mxu0 %v839
        %v912 = vpop.f32.mrb[0].mxu0
        %v913 = vadd.f32 %v428, %v912
        %v914 = vpop.f32.mrb[0].mxu0
        %915 = vdwg.mxu0
        %v917 = vsel %vm429, %v399, 0
        %v920 = vsel %vm429, %v400, 0
        %922 = vmatprep.subr.mxu0 0.0
        %923 = vmatpush1.msra.mxu0 %v409
        %924 = vmatprep.subr.mxu0 0.0
        %925 = vmatpush1.msra.mxu0 0.0
        %926 = vmatprep.subr.mxu0 0.0
        %927 = vmatpush1.msra.mxu0 0.0
        %928 = vmatprep.subr.mxu0 0.0
        %929 = vmatpush1.msra.mxu0 0.0
        %930 = vmatprep.subr.mxu0 0.0
        %931 = vmatpush1.msra.mxu0 0.0
        %932 = vmatprep.subr.mxu0 0.0
        %933 = vmatpush1.msra.mxu0 0.0
        %934 = vmatprep.subr.mxu0 0.0
        %935 = vmatpush1.msra.mxu0 0.0
        %936 = vmatprep.subr.mxu0 0.0
        %937 = vmatpush1.msra.mxu0 0.0
        %938 = vmatprep.subr.mxu0 0.0
        %939 = vmatpush1.msra.mxu0 0.0
        %940 = vmatprep.subr.mxu0 0.0
        %941 = vmatpush1.msra.mxu0 0.0
        %942 = vmatprep.subr.mxu0 0.0
        %943 = vmatpush1.msra.mxu0 0.0
        %944 = vmatprep.subr.mxu0 0.0
        %945 = vmatpush1.msra.mxu0 0.0
        %946 = vmatprep.subr.mxu0 0.0
        %947 = vmatpush1.msra.mxu0 0.0
        %948 = vmatprep.subr.mxu0 0.0
        %949 = vmatpush1.msra.mxu0 0.0
        %950 = vmatprep.subr.mxu0 0.0
        %951 = vmatpush1.msra.mxu0 0.0
        %952 = vmatprep.subr.mxu0 0.0
        %953 = vmatpush1.msra.mxu0 0.0
        %954 = vmatprep.subr.mxu0 0.0
        %955 = vmatpush1.msra.mxu0 0.0
        %956 = vmatprep.subr.mxu0 0.0
        %957 = vmatpush1.msra.mxu0 0.0
        %958 = vmatprep.subr.mxu0 0.0
        %959 = vmatpush1.msra.mxu0 0.0
        %960 = vmatprep.subr.mxu0 0.0
        %961 = vmatpush1.msra.mxu0 0.0
        %962 = vmatprep.subr.mxu0 0.0
        %963 = vmatpush1.msra.mxu0 0.0
        %964 = vmatprep.subr.mxu0 0.0
        %965 = vmatpush1.msra.mxu0 0.0
        %966 = vmatprep.subr.mxu0 0.0
        %967 = vmatpush1.msra.mxu0 0.0
        %968 = vmatprep.subr.mxu0 0.0
        %969 = vmatpush1.msra.mxu0 0.0
        %970 = vmatprep.subr.mxu0 0.0
        %971 = vmatpush1.msra.mxu0 0.0
        %972 = vmatprep.subr.mxu0 0.0
        %973 = vmatpush1.msra.mxu0 0.0
        %974 = vmatprep.subr.mxu0 0.0
        %975 = vmatpush1.msra.mxu0 0.0
        %976 = vmatprep.subr.mxu0 0.0
        %977 = vmatpush1.msra.mxu0 0.0
        %978 = vmatprep.subr.mxu0 0.0
        %979 = vmatpush1.msra.mxu0 0.0
        %980 = vmatprep.subr.mxu0 0.0
        %981 = vmatpush1.msra.mxu0 0.0
        %982 = vmatprep.subr.mxu0 0.0
        %983 = vmatpush1.msra.mxu0 0.0
        %984 = vmatprep.subr.mxu0 0.0
        %985 = vmatpush1.msra.mxu0 0.0
        %986 = vmatprep.mubr.f32.mxu0 0.0
        %987 = vmatmul.mubr.f32.gmra.mrb[0].mxu0 %v917
        %v988 = vpop.f32.mrb[0].mxu0
        %v989 = vadd.f32 %v427, %v988
        %v990 = vpop.f32.mrb[0].mxu0
        %991 = vmatprep.mubr.f32.mxu0 0.0
        %992 = vmatmul.mubr.f32.gmra.mrb[0].mxu0 %v920
        %v993 = vpop.f32.mrb[0].mxu0
        %v994 = vadd.f32 %v428, %v993
        %v995 = vpop.f32.mrb[0].mxu0
        %996 = vdwg.mxu0
        %v998 = vsel %vm429, %v401, 0
        %v1001 = vsel %vm429, %v402, 0
        %1003 = vmatprep.subr.mxu0 0.0
        %1004 = vmatpush1.msra.mxu0 %v410
        %1005 = vmatprep.subr.mxu0 0.0
        %1006 = vmatpush1.msra.mxu0 0.0
        %1007 = vmatprep.subr.mxu0 0.0
        %1008 = vmatpush1.msra.mxu0 0.0
        %1009 = vmatprep.subr.mxu0 0.0
        %1010 = vmatpush1.msra.mxu0 0.0
        %1011 = vmatprep.subr.mxu0 0.0
        %1012 = vmatpush1.msra.mxu0 0.0
        %1013 = vmatprep.subr.mxu0 0.0
        %1014 = vmatpush1.msra.mxu0 0.0
        %1015 = vmatprep.subr.mxu0 0.0
        %1016 = vmatpush1.msra.mxu0 0.0
        %1017 = vmatprep.subr.mxu0 0.0
        %1018 = vmatpush1.msra.mxu0 0.0
        %1019 = vmatprep.subr.mxu0 0.0
        %1020 = vmatpush1.msra.mxu0 0.0
        %1021 = vmatprep.subr.mxu0 0.0
        %1022 = vmatpush1.msra.mxu0 0.0
        %1023 = vmatprep.subr.mxu0 0.0
        %1024 = vmatpush1.msra.mxu0 0.0
        %1025 = vmatprep.subr.mxu0 0.0
        %1026 = vmatpush1.msra.mxu0 0.0
        %1027 = vmatprep.subr.mxu0 0.0
        %1028 = vmatpush1.msra.mxu0 0.0
        %1029 = vmatprep.subr.mxu0 0.0
        %1030 = vmatpush1.msra.mxu0 0.0
        %1031 = vmatprep.subr.mxu0 0.0
        %1032 = vmatpush1.msra.mxu0 0.0
        %1033 = vmatprep.subr.mxu0 0.0
        %1034 = vmatpush1.msra.mxu0 0.0
        %1035 = vmatprep.subr.mxu0 0.0
        %1036 = vmatpush1.msra.mxu0 0.0
        %1037 = vmatprep.subr.mxu0 0.0
        %1038 = vmatpush1.msra.mxu0 0.0
        %1039 = vmatprep.subr.mxu0 0.0
        %1040 = vmatpush1.msra.mxu0 0.0
        %1041 = vmatprep.subr.mxu0 0.0
        %1042 = vmatpush1.msra.mxu0 0.0
        %1043 = vmatprep.subr.mxu0 0.0
        %1044 = vmatpush1.msra.mxu0 0.0
        %1045 = vmatprep.subr.mxu0 0.0
        %1046 = vmatpush1.msra.mxu0 0.0
        %1047 = vmatprep.subr.mxu0 0.0
        %1048 = vmatpush1.msra.mxu0 0.0
        %1049 = vmatprep.subr.mxu0 0.0
        %1050 = vmatpush1.msra.mxu0 0.0
        %1051 = vmatprep.subr.mxu0 0.0
        %1052 = vmatpush1.msra.mxu0 0.0
        %1053 = vmatprep.subr.mxu0 0.0
        %1054 = vmatpush1.msra.mxu0 0.0
        %1055 = vmatprep.subr.mxu0 0.0
        %1056 = vmatpush1.msra.mxu0 0.0
        %1057 = vmatprep.subr.mxu0 0.0
        %1058 = vmatpush1.msra.mxu0 0.0
        %1059 = vmatprep.subr.mxu0 0.0
        %1060 = vmatpush1.msra.mxu0 0.0
        %1061 = vmatprep.subr.mxu0 0.0
        %1062 = vmatpush1.msra.mxu0 0.0
        %1063 = vmatprep.subr.mxu0 0.0
        %1064 = vmatpush1.msra.mxu0 0.0
        %1065 = vmatprep.subr.mxu0 0.0
        %1066 = vmatpush1.msra.mxu0 0.0
        %1067 = vmatprep.mubr.f32.mxu0 0.0
        %1068 = vmatmul.mubr.f32.gmra.mrb[0].mxu0 %v998
        %v1069 = vpop.f32.mrb[0].mxu0
        %v1070 = vadd.f32 %v427, %v1069
        %v1071 = vpop.f32.mrb[0].mxu0
        %1072 = vmatprep.mubr.f32.mxu0 0.0
        %1073 = vmatmul.mubr.f32.gmra.mrb[0].mxu0 %v1001
        %v1074 = vpop.f32.mrb[0].mxu0
        %v1075 = vadd.f32 %v428, %v1074
        %v1076 = vpop.f32.mrb[0].mxu0
        %1077 = vdwg.mxu0
        %v1078 = vld [vmem:[%s368] sm:$0x1]
        %v1080 = vlaneseq
        %v1081 = vshrl.u32 %v1080, 7
        %v1082 = vsub.s32 0, %v1081
        %v1083 = vrot.slane %v1078, %v1082
        %v1085 = vadd.f32 %v503, %v1083
        %v1086 = vadd.f32 %v508, %v1083
        %v1087 = vadd.f32 %v584, %v1083
        %v1088 = vadd.f32 %v589, %v1083
        %v1089 = vadd.f32 %v665, %v1083
        %v1090 = vadd.f32 %v670, %v1083
        %v1091 = vadd.f32 %v746, %v1083
        %v1092 = vadd.f32 %v751, %v1083
        %v1093 = vadd.f32 %v827, %v1083
        %v1094 = vadd.f32 %v832, %v1083
        %v1095 = vadd.f32 %v908, %v1083
        %v1096 = vadd.f32 %v913, %v1083
        %v1097 = vadd.f32 %v989, %v1083
        %v1098 = vadd.f32 %v994, %v1083
        %v1099 = vadd.f32 %v1070, %v1083
        %v1100 = vadd.f32 %v1075, %v1083
        %vm1101 = vcmask 130048
        %v1102 = vsel %vm1101, %v1085, -inf
        %1103 = vmax.xlane.f32.xlu0 %v1102
        %v1104 = vpop.xlane.xlu0 %1103
        %v1105 = vsel %vm1101, %v1086, -inf
        %1106 = vmax.xlane.f32.xlu0 %v1105
        %v1107 = vpop.xlane.xlu0 %1106
        %v1108 = vsel %vm1101, %v1087, -inf
        %1109 = vmax.xlane.f32.xlu0 %v1108
        %v1110 = vpop.xlane.xlu0 %1109
        %v1111 = vsel %vm1101, %v1088, -inf
        %1112 = vmax.xlane.f32.xlu0 %v1111
        %v1113 = vpop.xlane.xlu0 %1112
        %v1114 = vsel %vm1101, %v1089, -inf
        %1115 = vmax.xlane.f32.xlu0 %v1114
        %v1116 = vpop.xlane.xlu0 %1115
        %v1117 = vsel %vm1101, %v1090, -inf
        %1118 = vmax.xlane.f32.xlu0 %v1117
        %v1119 = vpop.xlane.xlu0 %1118
        %v1120 = vsel %vm1101, %v1091, -inf
        %1121 = vmax.xlane.f32.xlu0 %v1120
        %v1122 = vpop.xlane.xlu0 %1121
        %v1123 = vsel %vm1101, %v1092, -inf
        %1124 = vmax.xlane.f32.xlu0 %v1123
        %v1125 = vpop.xlane.xlu0 %1124
        %v1126 = vsel %vm1101, %v1093, -inf
        %1127 = vmax.xlane.f32.xlu0 %v1126
        %v1128 = vpop.xlane.xlu0 %1127
        %v1129 = vsel %vm1101, %v1094, -inf
        %1130 = vmax.xlane.f32.xlu0 %v1129
        %v1131 = vpop.xlane.xlu0 %1130
        %v1132 = vsel %vm1101, %v1095, -inf
        %1133 = vmax.xlane.f32.xlu0 %v1132
        %v1134 = vpop.xlane.xlu0 %1133
        %v1135 = vsel %vm1101, %v1096, -inf
        %1136 = vmax.xlane.f32.xlu0 %v1135
        %v1137 = vpop.xlane.xlu0 %1136
        %v1138 = vsel %vm1101, %v1097, -inf
        %1139 = vmax.xlane.f32.xlu0 %v1138
        %v1140 = vpop.xlane.xlu0 %1139
        %v1141 = vsel %vm1101, %v1098, -inf
        %1142 = vmax.xlane.f32.xlu0 %v1141
        %v1143 = vpop.xlane.xlu0 %1142
        %v1144 = vsel %vm1101, %v1099, -inf
        %1145 = vmax.xlane.f32.xlu0 %v1144
        %v1146 = vpop.xlane.xlu0 %1145
        %v1147 = vsel %vm1101, %v1100, -inf
        %1148 = vmax.xlane.f32.xlu0 %v1147
        %v1149 = vpop.xlane.xlu0 %1148
        %v1150 = vsub.f32 %v1085, %v1104
        %v1151 = vsub.f32 %v1086, %v1107
        %v1152 = vsub.f32 %v1087, %v1110
        %v1153 = vsub.f32 %v1088, %v1113
        %v1154 = vsub.f32 %v1089, %v1116
        %v1155 = vsub.f32 %v1090, %v1119
        %v1156 = vsub.f32 %v1091, %v1122
        %v1157 = vsub.f32 %v1092, %v1125
        %v1158 = vsub.f32 %v1093, %v1128
        %v1159 = vsub.f32 %v1094, %v1131
        %v1160 = vsub.f32 %v1095, %v1134
        %v1161 = vsub.f32 %v1096, %v1137
        %v1162 = vsub.f32 %v1097, %v1140
        %v1163 = vsub.f32 %v1098, %v1143
        %v1164 = vsub.f32 %v1099, %v1146
        %v1165 = vsub.f32 %v1100, %v1149
        %v1166 = vmul.f32 %v1150, 1.442695
        %v1167 = vpow.pop %v1166
        %v1168 = vmul.f32 %v1151, 1.442695
        %v1169 = vpow.pop %v1168
        %v1170 = vmul.f32 %v1152, 1.442695
        %v1171 = vpow.pop %v1170
        %v1172 = vmul.f32 %v1153, 1.442695
        %v1173 = vpow.pop %v1172
        %v1174 = vmul.f32 %v1154, 1.442695
        %v1175 = vpow.pop %v1174
        %v1176 = vmul.f32 %v1155, 1.442695
        %v1177 = vpow.pop %v1176
        %v1178 = vmul.f32 %v1156, 1.442695
        %v1179 = vpow.pop %v1178
        %v1180 = vmul.f32 %v1157, 1.442695
        %v1181 = vpow.pop %v1180
        %v1182 = vmul.f32 %v1158, 1.442695
        %v1183 = vpow.pop %v1182
        %v1184 = vmul.f32 %v1159, 1.442695
        %v1185 = vpow.pop %v1184
        %v1186 = vmul.f32 %v1160, 1.442695
        %v1187 = vpow.pop %v1186
        %v1188 = vmul.f32 %v1161, 1.442695
        %v1189 = vpow.pop %v1188
        %v1190 = vmul.f32 %v1162, 1.442695
        %v1191 = vpow.pop %v1190
        %v1192 = vmul.f32 %v1163, 1.442695
        %v1193 = vpow.pop %v1192
        %v1194 = vmul.f32 %v1164, 1.442695
        %v1195 = vpow.pop %v1194
        %v1196 = vmul.f32 %v1165, 1.442695
        %v1197 = vpow.pop %v1196
        %v1198 = vsel %vm1101, %v1167, 0.0
        %1199 = vadd.xlane.f32.xlu0 %v1198
        %v1200 = vpop.xlane.xlu0 %1199
        %v1201 = vsel %vm1101, %v1169, 0.0
        %1202 = vadd.xlane.f32.xlu0 %v1201
        %v1203 = vpop.xlane.xlu0 %1202
        %v1204 = vsel %vm1101, %v1171, 0.0
        %1205 = vadd.xlane.f32.xlu0 %v1204
        %v1206 = vpop.xlane.xlu0 %1205
        %v1207 = vsel %vm1101, %v1173, 0.0
        %1208 = vadd.xlane.f32.xlu0 %v1207
        %v1209 = vpop.xlane.xlu0 %1208
        %v1210 = vsel %vm1101, %v1175, 0.0
        %1211 = vadd.xlane.f32.xlu0 %v1210
        %v1212 = vpop.xlane.xlu0 %1211
        %v1213 = vsel %vm1101, %v1177, 0.0
        %1214 = vadd.xlane.f32.xlu0 %v1213
        %v1215 = vpop.xlane.xlu0 %1214
        %v1216 = vsel %vm1101, %v1179, 0.0
        %1217 = vadd.xlane.f32.xlu0 %v1216
        %v1218 = vpop.xlane.xlu0 %1217
        %v1219 = vsel %vm1101, %v1181, 0.0
        %1220 = vadd.xlane.f32.xlu0 %v1219
        %v1221 = vpop.xlane.xlu0 %1220
        %v1222 = vsel %vm1101, %v1183, 0.0
        %1223 = vadd.xlane.f32.xlu0 %v1222
        %v1224 = vpop.xlane.xlu0 %1223
        %v1225 = vsel %vm1101, %v1185, 0.0
        %1226 = vadd.xlane.f32.xlu0 %v1225
        %v1227 = vpop.xlane.xlu0 %1226
        %v1228 = vsel %vm1101, %v1187, 0.0
        %1229 = vadd.xlane.f32.xlu0 %v1228
        %v1230 = vpop.xlane.xlu0 %1229
        %v1231 = vsel %vm1101, %v1189, 0.0
        %1232 = vadd.xlane.f32.xlu0 %v1231
        %v1233 = vpop.xlane.xlu0 %1232
        %v1234 = vsel %vm1101, %v1191, 0.0
        %1235 = vadd.xlane.f32.xlu0 %v1234
        %v1236 = vpop.xlane.xlu0 %1235
        %v1237 = vsel %vm1101, %v1193, 0.0
        %1238 = vadd.xlane.f32.xlu0 %v1237
        %v1239 = vpop.xlane.xlu0 %1238
        %v1240 = vsel %vm1101, %v1195, 0.0
        %1241 = vadd.xlane.f32.xlu0 %v1240
        %v1242 = vpop.xlane.xlu0 %1241
        %v1243 = vsel %vm1101, %v1197, 0.0
        %1244 = vadd.xlane.f32.xlu0 %v1243
        %v1245 = vpop.xlane.xlu0 %1244
        %v1246 = vrcp.pop %v1200
        %v1247 = vmul.f32 %v1167, %v1246
        %v1248 = vrcp.pop %v1203
        %v1249 = vmul.f32 %v1169, %v1248
        %v1250 = vrcp.pop %v1206
        %v1251 = vmul.f32 %v1171, %v1250
        %v1252 = vrcp.pop %v1209
        %v1253 = vmul.f32 %v1173, %v1252
        %v1254 = vrcp.pop %v1212
        %v1255 = vmul.f32 %v1175, %v1254
        %v1256 = vrcp.pop %v1215
        %v1257 = vmul.f32 %v1177, %v1256
        %v1258 = vrcp.pop %v1218
        %v1259 = vmul.f32 %v1179, %v1258
        %v1260 = vrcp.pop %v1221
        %v1261 = vmul.f32 %v1181, %v1260
        %v1262 = vrcp.pop %v1224
        %v1263 = vmul.f32 %v1183, %v1262
        %v1264 = vrcp.pop %v1227
        %v1265 = vmul.f32 %v1185, %v1264
        %v1266 = vrcp.pop %v1230
        %v1267 = vmul.f32 %v1187, %v1266
        %v1268 = vrcp.pop %v1233
        %v1269 = vmul.f32 %v1189, %v1268
        %v1270 = vrcp.pop %v1236
        %v1271 = vmul.f32 %v1191, %v1270
        %v1272 = vrcp.pop %v1239
        %v1273 = vmul.f32 %v1193, %v1272
        %v1274 = vrcp.pop %v1242
        %v1275 = vmul.f32 %v1195, %v1274
        %v1276 = vrcp.pop %v1245
        %v1277 = vmul.f32 %v1197, %v1276
        %v1279 = vsel %vm1101, %v1247, 0
        %v1282 = vsel %vm1101, %v1249, 0
        %1284 = vmatprep.subr.mxu0 0.0
        %1285 = vmatpush1.msra.mxu0 %v411
        %1286 = vmatprep.subr.mxu0 0.0
        %1287 = vmatpush1.msra.mxu0 %v412
        %1288 = vmatprep.subr.mxu0 0.0
        %1289 = vmatpush1.msra.mxu0 0.0
        %1290 = vmatprep.subr.mxu0 0.0
        %1291 = vmatpush1.msra.mxu0 0.0
        %1292 = vmatprep.subr.mxu0 0.0
        %1293 = vmatpush1.msra.mxu0 0.0
        %1294 = vmatprep.subr.mxu0 0.0
        %1295 = vmatpush1.msra.mxu0 0.0
        %1296 = vmatprep.subr.mxu0 0.0
        %1297 = vmatpush1.msra.mxu0 0.0
        %1298 = vmatprep.subr.mxu0 0.0
        %1299 = vmatpush1.msra.mxu0 0.0
        %1300 = vmatprep.subr.mxu0 0.0
        %1301 = vmatpush1.msra.mxu0 0.0
        %1302 = vmatprep.subr.mxu0 0.0
        %1303 = vmatpush1.msra.mxu0 0.0
        %1304 = vmatprep.subr.mxu0 0.0
        %1305 = vmatpush1.msra.mxu0 0.0
        %1306 = vmatprep.subr.mxu0 0.0
        %1307 = vmatpush1.msra.mxu0 0.0
        %1308 = vmatprep.subr.mxu0 0.0
        %1309 = vmatpush1.msra.mxu0 0.0
        %1310 = vmatprep.subr.mxu0 0.0
        %1311 = vmatpush1.msra.mxu0 0.0
        %1312 = vmatprep.subr.mxu0 0.0
        %1313 = vmatpush1.msra.mxu0 0.0
        %1314 = vmatprep.subr.mxu0 0.0
        %1315 = vmatpush1.msra.mxu0 0.0
        %1316 = vmatprep.subr.mxu0 0.0
        %1317 = vmatpush1.msra.mxu0 0.0
        %1318 = vmatprep.subr.mxu0 0.0
        %1319 = vmatpush1.msra.mxu0 0.0
        %1320 = vmatprep.subr.mxu0 0.0
        %1321 = vmatpush1.msra.mxu0 0.0
        %1322 = vmatprep.subr.mxu0 0.0
        %1323 = vmatpush1.msra.mxu0 0.0
        %1324 = vmatprep.subr.mxu0 0.0
        %1325 = vmatpush1.msra.mxu0 0.0
        %1326 = vmatprep.subr.mxu0 0.0
        %1327 = vmatpush1.msra.mxu0 0.0
        %1328 = vmatprep.subr.mxu0 0.0
        %1329 = vmatpush1.msra.mxu0 0.0
        %1330 = vmatprep.subr.mxu0 0.0
        %1331 = vmatpush1.msra.mxu0 0.0
        %1332 = vmatprep.subr.mxu0 0.0
        %1333 = vmatpush1.msra.mxu0 0.0
        %1334 = vmatprep.subr.mxu0 0.0
        %1335 = vmatpush1.msra.mxu0 0.0
        %1336 = vmatprep.subr.mxu0 0.0
        %1337 = vmatpush1.msra.mxu0 0.0
        %1338 = vmatprep.subr.mxu0 0.0
        %1339 = vmatpush1.msra.mxu0 0.0
        %1340 = vmatprep.subr.mxu0 0.0
        %1341 = vmatpush1.msra.mxu0 0.0
        %1342 = vmatprep.subr.mxu0 0.0
        %1343 = vmatpush1.msra.mxu0 0.0
        %1344 = vmatprep.subr.mxu0 0.0
        %1345 = vmatpush1.msra.mxu0 0.0
        %1346 = vmatprep.subr.mxu0 0.0
        %1347 = vmatpush1.msra.mxu0 0.0
        %1348 = vmatprep.mubr.f32.mxu0 0.0
        %1349 = vmatmul.mubr.f32.gmra.mrb[0].mxu0 %v1279
        %v1350 = vpop.f32.mrb[0].mxu0
        %v1351 = vadd.f32 0.0, %v1350
        %v1352 = vpop.f32.mrb[0].mxu0
        %1353 = vmatprep.mubr.f32.mxu0 0.0
        %1354 = vmatmul.mubr.f32.gmra.mrb[0].mxu0 %v1282
        %v1355 = vpop.f32.mrb[0].mxu0
        %v1356 = vadd.f32 0.0, %v1355
        %v1357 = vpop.f32.mrb[0].mxu0
        %1358 = vdwg.mxu0
        %v1360 = vsel %vm1101, %v1251, 0
        %v1363 = vsel %vm1101, %v1253, 0
        %1365 = vmatprep.subr.mxu0 0.0
        %1366 = vmatpush1.msra.mxu0 %v413
        %1367 = vmatprep.subr.mxu0 0.0
        %1368 = vmatpush1.msra.mxu0 %v414
        %1369 = vmatprep.subr.mxu0 0.0
        %1370 = vmatpush1.msra.mxu0 0.0
        %1371 = vmatprep.subr.mxu0 0.0
        %1372 = vmatpush1.msra.mxu0 0.0
        %1373 = vmatprep.subr.mxu0 0.0
        %1374 = vmatpush1.msra.mxu0 0.0
        %1375 = vmatprep.subr.mxu0 0.0
        %1376 = vmatpush1.msra.mxu0 0.0
        %1377 = vmatprep.subr.mxu0 0.0
        %1378 = vmatpush1.msra.mxu0 0.0
        %1379 = vmatprep.subr.mxu0 0.0
        %1380 = vmatpush1.msra.mxu0 0.0
        %1381 = vmatprep.subr.mxu0 0.0
        %1382 = vmatpush1.msra.mxu0 0.0
        %1383 = vmatprep.subr.mxu0 0.0
        %1384 = vmatpush1.msra.mxu0 0.0
        %1385 = vmatprep.subr.mxu0 0.0
        %1386 = vmatpush1.msra.mxu0 0.0
        %1387 = vmatprep.subr.mxu0 0.0
        %1388 = vmatpush1.msra.mxu0 0.0
        %1389 = vmatprep.subr.mxu0 0.0
        %1390 = vmatpush1.msra.mxu0 0.0
        %1391 = vmatprep.subr.mxu0 0.0
        %1392 = vmatpush1.msra.mxu0 0.0
        %1393 = vmatprep.subr.mxu0 0.0
        %1394 = vmatpush1.msra.mxu0 0.0
        %1395 = vmatprep.subr.mxu0 0.0
        %1396 = vmatpush1.msra.mxu0 0.0
        %1397 = vmatprep.subr.mxu0 0.0
        %1398 = vmatpush1.msra.mxu0 0.0
        %1399 = vmatprep.subr.mxu0 0.0
        %1400 = vmatpush1.msra.mxu0 0.0
        %1401 = vmatprep.subr.mxu0 0.0
        %1402 = vmatpush1.msra.mxu0 0.0
        %1403 = vmatprep.subr.mxu0 0.0
        %1404 = vmatpush1.msra.mxu0 0.0
        %1405 = vmatprep.subr.mxu0 0.0
        %1406 = vmatpush1.msra.mxu0 0.0
        %1407 = vmatprep.subr.mxu0 0.0
        %1408 = vmatpush1.msra.mxu0 0.0
        %1409 = vmatprep.subr.mxu0 0.0
        %1410 = vmatpush1.msra.mxu0 0.0
        %1411 = vmatprep.subr.mxu0 0.0
        %1412 = vmatpush1.msra.mxu0 0.0
        %1413 = vmatprep.subr.mxu0 0.0
        %1414 = vmatpush1.msra.mxu0 0.0
        %1415 = vmatprep.subr.mxu0 0.0
        %1416 = vmatpush1.msra.mxu0 0.0
        %1417 = vmatprep.subr.mxu0 0.0
        %1418 = vmatpush1.msra.mxu0 0.0
        %1419 = vmatprep.subr.mxu0 0.0
        %1420 = vmatpush1.msra.mxu0 0.0
        %1421 = vmatprep.subr.mxu0 0.0
        %1422 = vmatpush1.msra.mxu0 0.0
        %1423 = vmatprep.subr.mxu0 0.0
        %1424 = vmatpush1.msra.mxu0 0.0
        %1425 = vmatprep.subr.mxu0 0.0
        %1426 = vmatpush1.msra.mxu0 0.0
        %1427 = vmatprep.subr.mxu0 0.0
        %1428 = vmatpush1.msra.mxu0 0.0
        %1429 = vmatprep.mubr.f32.mxu0 0.0
        %1430 = vmatmul.mubr.f32.gmra.mrb[0].mxu0 %v1360
        %v1431 = vpop.f32.mrb[0].mxu0
        %v1432 = vadd.f32 0.0, %v1431
        %v1433 = vpop.f32.mrb[0].mxu0
        %1434 = vmatprep.mubr.f32.mxu0 0.0
        %1435 = vmatmul.mubr.f32.gmra.mrb[0].mxu0 %v1363
        %v1436 = vpop.f32.mrb[0].mxu0
        %v1437 = vadd.f32 0.0, %v1436
        %v1438 = vpop.f32.mrb[0].mxu0
        %1439 = vdwg.mxu0
        %v1441 = vsel %vm1101, %v1255, 0
        %v1444 = vsel %vm1101, %v1257, 0
        %1446 = vmatprep.subr.mxu0 0.0
        %1447 = vmatpush1.msra.mxu0 %v415
        %1448 = vmatprep.subr.mxu0 0.0
        %1449 = vmatpush1.msra.mxu0 %v416
        %1450 = vmatprep.subr.mxu0 0.0
        %1451 = vmatpush1.msra.mxu0 0.0
        %1452 = vmatprep.subr.mxu0 0.0
        %1453 = vmatpush1.msra.mxu0 0.0
        %1454 = vmatprep.subr.mxu0 0.0
        %1455 = vmatpush1.msra.mxu0 0.0
        %1456 = vmatprep.subr.mxu0 0.0
        %1457 = vmatpush1.msra.mxu0 0.0
        %1458 = vmatprep.subr.mxu0 0.0
        %1459 = vmatpush1.msra.mxu0 0.0
        %1460 = vmatprep.subr.mxu0 0.0
        %1461 = vmatpush1.msra.mxu0 0.0
        %1462 = vmatprep.subr.mxu0 0.0
        %1463 = vmatpush1.msra.mxu0 0.0
        %1464 = vmatprep.subr.mxu0 0.0
        %1465 = vmatpush1.msra.mxu0 0.0
        %1466 = vmatprep.subr.mxu0 0.0
        %1467 = vmatpush1.msra.mxu0 0.0
        %1468 = vmatprep.subr.mxu0 0.0
        %1469 = vmatpush1.msra.mxu0 0.0
        %1470 = vmatprep.subr.mxu0 0.0
        %1471 = vmatpush1.msra.mxu0 0.0
        %1472 = vmatprep.subr.mxu0 0.0
        %1473 = vmatpush1.msra.mxu0 0.0
        %1474 = vmatprep.subr.mxu0 0.0
        %1475 = vmatpush1.msra.mxu0 0.0
        %1476 = vmatprep.subr.mxu0 0.0
        %1477 = vmatpush1.msra.mxu0 0.0
        %1478 = vmatprep.subr.mxu0 0.0
        %1479 = vmatpush1.msra.mxu0 0.0
        %1480 = vmatprep.subr.mxu0 0.0
        %1481 = vmatpush1.msra.mxu0 0.0
        %1482 = vmatprep.subr.mxu0 0.0
        %1483 = vmatpush1.msra.mxu0 0.0
        %1484 = vmatprep.subr.mxu0 0.0
        %1485 = vmatpush1.msra.mxu0 0.0
        %1486 = vmatprep.subr.mxu0 0.0
        %1487 = vmatpush1.msra.mxu0 0.0
        %1488 = vmatprep.subr.mxu0 0.0
        %1489 = vmatpush1.msra.mxu0 0.0
        %1490 = vmatprep.subr.mxu0 0.0
        %1491 = vmatpush1.msra.mxu0 0.0
        %1492 = vmatprep.subr.mxu0 0.0
        %1493 = vmatpush1.msra.mxu0 0.0
        %1494 = vmatprep.subr.mxu0 0.0
        %1495 = vmatpush1.msra.mxu0 0.0
        %1496 = vmatprep.subr.mxu0 0.0
        %1497 = vmatpush1.msra.mxu0 0.0
        %1498 = vmatprep.subr.mxu0 0.0
        %1499 = vmatpush1.msra.mxu0 0.0
        %1500 = vmatprep.subr.mxu0 0.0
        %1501 = vmatpush1.msra.mxu0 0.0
        %1502 = vmatprep.subr.mxu0 0.0
        %1503 = vmatpush1.msra.mxu0 0.0
        %1504 = vmatprep.subr.mxu0 0.0
        %1505 = vmatpush1.msra.mxu0 0.0
        %1506 = vmatprep.subr.mxu0 0.0
        %1507 = vmatpush1.msra.mxu0 0.0
        %1508 = vmatprep.subr.mxu0 0.0
        %1509 = vmatpush1.msra.mxu0 0.0
        %1510 = vmatprep.mubr.f32.mxu0 0.0
        %1511 = vmatmul.mubr.f32.gmra.mrb[0].mxu0 %v1441
        %v1512 = vpop.f32.mrb[0].mxu0
        %v1513 = vadd.f32 0.0, %v1512
        %v1514 = vpop.f32.mrb[0].mxu0
        %1515 = vmatprep.mubr.f32.mxu0 0.0
        %1516 = vmatmul.mubr.f32.gmra.mrb[0].mxu0 %v1444
        %v1517 = vpop.f32.mrb[0].mxu0
        %v1518 = vadd.f32 0.0, %v1517
        %v1519 = vpop.f32.mrb[0].mxu0
        %1520 = vdwg.mxu0
        %v1522 = vsel %vm1101, %v1259, 0
        %v1525 = vsel %vm1101, %v1261, 0
        %1527 = vmatprep.subr.mxu0 0.0
        %1528 = vmatpush1.msra.mxu0 %v417
        %1529 = vmatprep.subr.mxu0 0.0
        %1530 = vmatpush1.msra.mxu0 %v418
        %1531 = vmatprep.subr.mxu0 0.0
        %1532 = vmatpush1.msra.mxu0 0.0
        %1533 = vmatprep.subr.mxu0 0.0
        %1534 = vmatpush1.msra.mxu0 0.0
        %1535 = vmatprep.subr.mxu0 0.0
        %1536 = vmatpush1.msra.mxu0 0.0
        %1537 = vmatprep.subr.mxu0 0.0
        %1538 = vmatpush1.msra.mxu0 0.0
        %1539 = vmatprep.subr.mxu0 0.0
        %1540 = vmatpush1.msra.mxu0 0.0
        %1541 = vmatprep.subr.mxu0 0.0
        %1542 = vmatpush1.msra.mxu0 0.0
        %1543 = vmatprep.subr.mxu0 0.0
        %1544 = vmatpush1.msra.mxu0 0.0
        %1545 = vmatprep.subr.mxu0 0.0
        %1546 = vmatpush1.msra.mxu0 0.0
        %1547 = vmatprep.subr.mxu0 0.0
        %1548 = vmatpush1.msra.mxu0 0.0
        %1549 = vmatprep.subr.mxu0 0.0
        %1550 = vmatpush1.msra.mxu0 0.0
        %1551 = vmatprep.subr.mxu0 0.0
        %1552 = vmatpush1.msra.mxu0 0.0
        %1553 = vmatprep.subr.mxu0 0.0
        %1554 = vmatpush1.msra.mxu0 0.0
        %1555 = vmatprep.subr.mxu0 0.0
        %1556 = vmatpush1.msra.mxu0 0.0
        %1557 = vmatprep.subr.mxu0 0.0
        %1558 = vmatpush1.msra.mxu0 0.0
        %1559 = vmatprep.subr.mxu0 0.0
        %1560 = vmatpush1.msra.mxu0 0.0
        %1561 = vmatprep.subr.mxu0 0.0
        %1562 = vmatpush1.msra.mxu0 0.0
        %1563 = vmatprep.subr.mxu0 0.0
        %1564 = vmatpush1.msra.mxu0 0.0
        %1565 = vmatprep.subr.mxu0 0.0
        %1566 = vmatpush1.msra.mxu0 0.0
        %1567 = vmatprep.subr.mxu0 0.0
        %1568 = vmatpush1.msra.mxu0 0.0
        %1569 = vmatprep.subr.mxu0 0.0
        %1570 = vmatpush1.msra.mxu0 0.0
        %1571 = vmatprep.subr.mxu0 0.0
        %1572 = vmatpush1.msra.mxu0 0.0
        %1573 = vmatprep.subr.mxu0 0.0
        %1574 = vmatpush1.msra.mxu0 0.0
        %1575 = vmatprep.subr.mxu0 0.0
        %1576 = vmatpush1.msra.mxu0 0.0
        %1577 = vmatprep.subr.mxu0 0.0
        %1578 = vmatpush1.msra.mxu0 0.0
        %1579 = vmatprep.subr.mxu0 0.0
        %1580 = vmatpush1.msra.mxu0 0.0
        %1581 = vmatprep.subr.mxu0 0.0
        %1582 = vmatpush1.msra.mxu0 0.0
        %1583 = vmatprep.subr.mxu0 0.0
        %1584 = vmatpush1.msra.mxu0 0.0
        %1585 = vmatprep.subr.mxu0 0.0
        %1586 = vmatpush1.msra.mxu0 0.0
        %1587 = vmatprep.subr.mxu0 0.0
        %1588 = vmatpush1.msra.mxu0 0.0
        %1589 = vmatprep.subr.mxu0 0.0
        %1590 = vmatpush1.msra.mxu0 0.0
        %1591 = vmatprep.mubr.f32.mxu0 0.0
        %1592 = vmatmul.mubr.f32.gmra.mrb[0].mxu0 %v1522
        %v1593 = vpop.f32.mrb[0].mxu0
        %v1594 = vadd.f32 0.0, %v1593
        %v1595 = vpop.f32.mrb[0].mxu0
        %1596 = vmatprep.mubr.f32.mxu0 0.0
        %1597 = vmatmul.mubr.f32.gmra.mrb[0].mxu0 %v1525
        %v1598 = vpop.f32.mrb[0].mxu0
        %v1599 = vadd.f32 0.0, %v1598
        %v1600 = vpop.f32.mrb[0].mxu0
        %1601 = vdwg.mxu0
        %v1603 = vsel %vm1101, %v1263, 0
        %v1606 = vsel %vm1101, %v1265, 0
        %1608 = vmatprep.subr.mxu0 0.0
        %1609 = vmatpush1.msra.mxu0 %v419
        %1610 = vmatprep.subr.mxu0 0.0
        %1611 = vmatpush1.msra.mxu0 %v420
        %1612 = vmatprep.subr.mxu0 0.0
        %1613 = vmatpush1.msra.mxu0 0.0
        %1614 = vmatprep.subr.mxu0 0.0
        %1615 = vmatpush1.msra.mxu0 0.0
        %1616 = vmatprep.subr.mxu0 0.0
        %1617 = vmatpush1.msra.mxu0 0.0
        %1618 = vmatprep.subr.mxu0 0.0
        %1619 = vmatpush1.msra.mxu0 0.0
        %1620 = vmatprep.subr.mxu0 0.0
        %1621 = vmatpush1.msra.mxu0 0.0
        %1622 = vmatprep.subr.mxu0 0.0
        %1623 = vmatpush1.msra.mxu0 0.0
        %1624 = vmatprep.subr.mxu0 0.0
        %1625 = vmatpush1.msra.mxu0 0.0
        %1626 = vmatprep.subr.mxu0 0.0
        %1627 = vmatpush1.msra.mxu0 0.0
        %1628 = vmatprep.subr.mxu0 0.0
        %1629 = vmatpush1.msra.mxu0 0.0
        %1630 = vmatprep.subr.mxu0 0.0
        %1631 = vmatpush1.msra.mxu0 0.0
        %1632 = vmatprep.subr.mxu0 0.0
        %1633 = vmatpush1.msra.mxu0 0.0
        %1634 = vmatprep.subr.mxu0 0.0
        %1635 = vmatpush1.msra.mxu0 0.0
        %1636 = vmatprep.subr.mxu0 0.0
        %1637 = vmatpush1.msra.mxu0 0.0
        %1638 = vmatprep.subr.mxu0 0.0
        %1639 = vmatpush1.msra.mxu0 0.0
        %1640 = vmatprep.subr.mxu0 0.0
        %1641 = vmatpush1.msra.mxu0 0.0
        %1642 = vmatprep.subr.mxu0 0.0
        %1643 = vmatpush1.msra.mxu0 0.0
        %1644 = vmatprep.subr.mxu0 0.0
        %1645 = vmatpush1.msra.mxu0 0.0
        %1646 = vmatprep.subr.mxu0 0.0
        %1647 = vmatpush1.msra.mxu0 0.0
        %1648 = vmatprep.subr.mxu0 0.0
        %1649 = vmatpush1.msra.mxu0 0.0
        %1650 = vmatprep.subr.mxu0 0.0
        %1651 = vmatpush1.msra.mxu0 0.0
        %1652 = vmatprep.subr.mxu0 0.0
        %1653 = vmatpush1.msra.mxu0 0.0
        %1654 = vmatprep.subr.mxu0 0.0
        %1655 = vmatpush1.msra.mxu0 0.0
        %1656 = vmatprep.subr.mxu0 0.0
        %1657 = vmatpush1.msra.mxu0 0.0
        %1658 = vmatprep.subr.mxu0 0.0
        %1659 = vmatpush1.msra.mxu0 0.0
        %1660 = vmatprep.subr.mxu0 0.0
        %1661 = vmatpush1.msra.mxu0 0.0
        %1662 = vmatprep.subr.mxu0 0.0
        %1663 = vmatpush1.msra.mxu0 0.0
        %1664 = vmatprep.subr.mxu0 0.0
        %1665 = vmatpush1.msra.mxu0 0.0
        %1666 = vmatprep.subr.mxu0 0.0
        %1667 = vmatpush1.msra.mxu0 0.0
        %1668 = vmatprep.subr.mxu0 0.0
        %1669 = vmatpush1.msra.mxu0 0.0
        %1670 = vmatprep.subr.mxu0 0.0
        %1671 = vmatpush1.msra.mxu0 0.0
        %1672 = vmatprep.mubr.f32.mxu0 0.0
        %1673 = vmatmul.mubr.f32.gmra.mrb[0].mxu0 %v1603
        %v1674 = vpop.f32.mrb[0].mxu0
        %v1675 = vadd.f32 0.0, %v1674
        %v1676 = vpop.f32.mrb[0].mxu0
        %1677 = vmatprep.mubr.f32.mxu0 0.0
        %1678 = vmatmul.mubr.f32.gmra.mrb[0].mxu0 %v1606
        %v1679 = vpop.f32.mrb[0].mxu0
        %v1680 = vadd.f32 0.0, %v1679
        %v1681 = vpop.f32.mrb[0].mxu0
        %1682 = vdwg.mxu0
        %v1684 = vsel %vm1101, %v1267, 0
        %v1687 = vsel %vm1101, %v1269, 0
        %1689 = vmatprep.subr.mxu0 0.0
        %1690 = vmatpush1.msra.mxu0 %v421
        %1691 = vmatprep.subr.mxu0 0.0
        %1692 = vmatpush1.msra.mxu0 %v422
        %1693 = vmatprep.subr.mxu0 0.0
        %1694 = vmatpush1.msra.mxu0 0.0
        %1695 = vmatprep.subr.mxu0 0.0
        %1696 = vmatpush1.msra.mxu0 0.0
        %1697 = vmatprep.subr.mxu0 0.0
        %1698 = vmatpush1.msra.mxu0 0.0
        %1699 = vmatprep.subr.mxu0 0.0
        %1700 = vmatpush1.msra.mxu0 0.0
        %1701 = vmatprep.subr.mxu0 0.0
        %1702 = vmatpush1.msra.mxu0 0.0
        %1703 = vmatprep.subr.mxu0 0.0
        %1704 = vmatpush1.msra.mxu0 0.0
        %1705 = vmatprep.subr.mxu0 0.0
        %1706 = vmatpush1.msra.mxu0 0.0
        %1707 = vmatprep.subr.mxu0 0.0
        %1708 = vmatpush1.msra.mxu0 0.0
        %1709 = vmatprep.subr.mxu0 0.0
        %1710 = vmatpush1.msra.mxu0 0.0
        %1711 = vmatprep.subr.mxu0 0.0
        %1712 = vmatpush1.msra.mxu0 0.0
        %1713 = vmatprep.subr.mxu0 0.0
        %1714 = vmatpush1.msra.mxu0 0.0
        %1715 = vmatprep.subr.mxu0 0.0
        %1716 = vmatpush1.msra.mxu0 0.0
        %1717 = vmatprep.subr.mxu0 0.0
        %1718 = vmatpush1.msra.mxu0 0.0
        %1719 = vmatprep.subr.mxu0 0.0
        %1720 = vmatpush1.msra.mxu0 0.0
        %1721 = vmatprep.subr.mxu0 0.0
        %1722 = vmatpush1.msra.mxu0 0.0
        %1723 = vmatprep.subr.mxu0 0.0
        %1724 = vmatpush1.msra.mxu0 0.0
        %1725 = vmatprep.subr.mxu0 0.0
        %1726 = vmatpush1.msra.mxu0 0.0
        %1727 = vmatprep.subr.mxu0 0.0
        %1728 = vmatpush1.msra.mxu0 0.0
        %1729 = vmatprep.subr.mxu0 0.0
        %1730 = vmatpush1.msra.mxu0 0.0
        %1731 = vmatprep.subr.mxu0 0.0
        %1732 = vmatpush1.msra.mxu0 0.0
        %1733 = vmatprep.subr.mxu0 0.0
        %1734 = vmatpush1.msra.mxu0 0.0
        %1735 = vmatprep.subr.mxu0 0.0
        %1736 = vmatpush1.msra.mxu0 0.0
        %1737 = vmatprep.subr.mxu0 0.0
        %1738 = vmatpush1.msra.mxu0 0.0
        %1739 = vmatprep.subr.mxu0 0.0
        %1740 = vmatpush1.msra.mxu0 0.0
        %1741 = vmatprep.subr.mxu0 0.0
        %1742 = vmatpush1.msra.mxu0 0.0
        %1743 = vmatprep.subr.mxu0 0.0
        %1744 = vmatpush1.msra.mxu0 0.0
        %1745 = vmatprep.subr.mxu0 0.0
        %1746 = vmatpush1.msra.mxu0 0.0
        %1747 = vmatprep.subr.mxu0 0.0
        %1748 = vmatpush1.msra.mxu0 0.0
        %1749 = vmatprep.subr.mxu0 0.0
        %1750 = vmatpush1.msra.mxu0 0.0
        %1751 = vmatprep.subr.mxu0 0.0
        %1752 = vmatpush1.msra.mxu0 0.0
        %1753 = vmatprep.mubr.f32.mxu0 0.0
        %1754 = vmatmul.mubr.f32.gmra.mrb[0].mxu0 %v1684
        %v1755 = vpop.f32.mrb[0].mxu0
        %v1756 = vadd.f32 0.0, %v1755
        %v1757 = vpop.f32.mrb[0].mxu0
        %1758 = vmatprep.mubr.f32.mxu0 0.0
        %1759 = vmatmul.mubr.f32.gmra.mrb[0].mxu0 %v1687
        %v1760 = vpop.f32.mrb[0].mxu0
        %v1761 = vadd.f32 0.0, %v1760
        %v1762 = vpop.f32.mrb[0].mxu0
        %1763 = vdwg.mxu0
        %v1765 = vsel %vm1101, %v1271, 0
        %v1768 = vsel %vm1101, %v1273, 0
        %1770 = vmatprep.subr.mxu0 0.0
        %1771 = vmatpush1.msra.mxu0 %v423
        %1772 = vmatprep.subr.mxu0 0.0
        %1773 = vmatpush1.msra.mxu0 %v424
        %1774 = vmatprep.subr.mxu0 0.0
        %1775 = vmatpush1.msra.mxu0 0.0
        %1776 = vmatprep.subr.mxu0 0.0
        %1777 = vmatpush1.msra.mxu0 0.0
        %1778 = vmatprep.subr.mxu0 0.0
        %1779 = vmatpush1.msra.mxu0 0.0
        %1780 = vmatprep.subr.mxu0 0.0
        %1781 = vmatpush1.msra.mxu0 0.0
        %1782 = vmatprep.subr.mxu0 0.0
        %1783 = vmatpush1.msra.mxu0 0.0
        %1784 = vmatprep.subr.mxu0 0.0
        %1785 = vmatpush1.msra.mxu0 0.0
        %1786 = vmatprep.subr.mxu0 0.0
        %1787 = vmatpush1.msra.mxu0 0.0
        %1788 = vmatprep.subr.mxu0 0.0
        %1789 = vmatpush1.msra.mxu0 0.0
        %1790 = vmatprep.subr.mxu0 0.0
        %1791 = vmatpush1.msra.mxu0 0.0
        %1792 = vmatprep.subr.mxu0 0.0
        %1793 = vmatpush1.msra.mxu0 0.0
        %1794 = vmatprep.subr.mxu0 0.0
        %1795 = vmatpush1.msra.mxu0 0.0
        %1796 = vmatprep.subr.mxu0 0.0
        %1797 = vmatpush1.msra.mxu0 0.0
        %1798 = vmatprep.subr.mxu0 0.0
        %1799 = vmatpush1.msra.mxu0 0.0
        %1800 = vmatprep.subr.mxu0 0.0
        %1801 = vmatpush1.msra.mxu0 0.0
        %1802 = vmatprep.subr.mxu0 0.0
        %1803 = vmatpush1.msra.mxu0 0.0
        %1804 = vmatprep.subr.mxu0 0.0
        %1805 = vmatpush1.msra.mxu0 0.0
        %1806 = vmatprep.subr.mxu0 0.0
        %1807 = vmatpush1.msra.mxu0 0.0
        %1808 = vmatprep.subr.mxu0 0.0
        %1809 = vmatpush1.msra.mxu0 0.0
        %1810 = vmatprep.subr.mxu0 0.0
        %1811 = vmatpush1.msra.mxu0 0.0
        %1812 = vmatprep.subr.mxu0 0.0
        %1813 = vmatpush1.msra.mxu0 0.0
        %1814 = vmatprep.subr.mxu0 0.0
        %1815 = vmatpush1.msra.mxu0 0.0
        %1816 = vmatprep.subr.mxu0 0.0
        %1817 = vmatpush1.msra.mxu0 0.0
        %1818 = vmatprep.subr.mxu0 0.0
        %1819 = vmatpush1.msra.mxu0 0.0
        %1820 = vmatprep.subr.mxu0 0.0
        %1821 = vmatpush1.msra.mxu0 0.0
        %1822 = vmatprep.subr.mxu0 0.0
        %1823 = vmatpush1.msra.mxu0 0.0
        %1824 = vmatprep.subr.mxu0 0.0
        %1825 = vmatpush1.msra.mxu0 0.0
        %1826 = vmatprep.subr.mxu0 0.0
        %1827 = vmatpush1.msra.mxu0 0.0
        %1828 = vmatprep.subr.mxu0 0.0
        %1829 = vmatpush1.msra.mxu0 0.0
        %1830 = vmatprep.subr.mxu0 0.0
        %1831 = vmatpush1.msra.mxu0 0.0
        %1832 = vmatprep.subr.mxu0 0.0
        %1833 = vmatpush1.msra.mxu0 0.0
        %1834 = vmatprep.mubr.f32.mxu0 0.0
        %1835 = vmatmul.mubr.f32.gmra.mrb[0].mxu0 %v1765
        %v1836 = vpop.f32.mrb[0].mxu0
        %v1837 = vadd.f32 0.0, %v1836
        %v1838 = vpop.f32.mrb[0].mxu0
        %1839 = vmatprep.mubr.f32.mxu0 0.0
        %1840 = vmatmul.mubr.f32.gmra.mrb[0].mxu0 %v1768
        %v1841 = vpop.f32.mrb[0].mxu0
        %v1842 = vadd.f32 0.0, %v1841
        %v1843 = vpop.f32.mrb[0].mxu0
        %1844 = vdwg.mxu0
        %v1846 = vsel %vm1101, %v1275, 0
        %v1849 = vsel %vm1101, %v1277, 0
        %1851 = vmatprep.subr.mxu0 0.0
        %1852 = vmatpush1.msra.mxu0 %v425
        %1853 = vmatprep.subr.mxu0 0.0
        %1854 = vmatpush1.msra.mxu0 %v426
        %1855 = vmatprep.subr.mxu0 0.0
        %1856 = vmatpush1.msra.mxu0 0.0
        %1857 = vmatprep.subr.mxu0 0.0
        %1858 = vmatpush1.msra.mxu0 0.0
        %1859 = vmatprep.subr.mxu0 0.0
        %1860 = vmatpush1.msra.mxu0 0.0
        %1861 = vmatprep.subr.mxu0 0.0
        %1862 = vmatpush1.msra.mxu0 0.0
        %1863 = vmatprep.subr.mxu0 0.0
        %1864 = vmatpush1.msra.mxu0 0.0
        %1865 = vmatprep.subr.mxu0 0.0
        %1866 = vmatpush1.msra.mxu0 0.0
        %1867 = vmatprep.subr.mxu0 0.0
        %1868 = vmatpush1.msra.mxu0 0.0
        %1869 = vmatprep.subr.mxu0 0.0
        %1870 = vmatpush1.msra.mxu0 0.0
        %1871 = vmatprep.subr.mxu0 0.0
        %1872 = vmatpush1.msra.mxu0 0.0
        %1873 = vmatprep.subr.mxu0 0.0
        %1874 = vmatpush1.msra.mxu0 0.0
        %1875 = vmatprep.subr.mxu0 0.0
        %1876 = vmatpush1.msra.mxu0 0.0
        %1877 = vmatprep.subr.mxu0 0.0
        %1878 = vmatpush1.msra.mxu0 0.0
        %1879 = vmatprep.subr.mxu0 0.0
        %1880 = vmatpush1.msra.mxu0 0.0
        %1881 = vmatprep.subr.mxu0 0.0
        %1882 = vmatpush1.msra.mxu0 0.0
        %1883 = vmatprep.subr.mxu0 0.0
        %1884 = vmatpush1.msra.mxu0 0.0
        %1885 = vmatprep.subr.mxu0 0.0
        %1886 = vmatpush1.msra.mxu0 0.0
        %1887 = vmatprep.subr.mxu0 0.0
        %1888 = vmatpush1.msra.mxu0 0.0
        %1889 = vmatprep.subr.mxu0 0.0
        %1890 = vmatpush1.msra.mxu0 0.0
        %1891 = vmatprep.subr.mxu0 0.0
        %1892 = vmatpush1.msra.mxu0 0.0
        %1893 = vmatprep.subr.mxu0 0.0
        %1894 = vmatpush1.msra.mxu0 0.0
        %1895 = vmatprep.subr.mxu0 0.0
        %1896 = vmatpush1.msra.mxu0 0.0
        %1897 = vmatprep.subr.mxu0 0.0
        %1898 = vmatpush1.msra.mxu0 0.0
        %1899 = vmatprep.subr.mxu0 0.0
        %1900 = vmatpush1.msra.mxu0 0.0
        %1901 = vmatprep.subr.mxu0 0.0
        %1902 = vmatpush1.msra.mxu0 0.0
        %1903 = vmatprep.subr.mxu0 0.0
        %1904 = vmatpush1.msra.mxu0 0.0
        %1905 = vmatprep.subr.mxu0 0.0
        %1906 = vmatpush1.msra.mxu0 0.0
        %1907 = vmatprep.subr.mxu0 0.0
        %1908 = vmatpush1.msra.mxu0 0.0
        %1909 = vmatprep.subr.mxu0 0.0
        %1910 = vmatpush1.msra.mxu0 0.0
        %1911 = vmatprep.subr.mxu0 0.0
        %1912 = vmatpush1.msra.mxu0 0.0
        %1913 = vmatprep.subr.mxu0 0.0
        %1914 = vmatpush1.msra.mxu0 0.0
        %1915 = vmatprep.mubr.f32.mxu0 0.0
        %1916 = vmatmul.mubr.f32.gmra.mrb[0].mxu0 %v1846
        %v1917 = vpop.f32.mrb[0].mxu0
        %v1918 = vadd.f32 0.0, %v1917
        %v1919 = vpop.f32.mrb[0].mxu0
        %1920 = vmatprep.mubr.f32.mxu0 0.0
        %1921 = vmatmul.mubr.f32.gmra.mrb[0].mxu0 %v1849
        %v1922 = vpop.f32.mrb[0].mxu0
        %v1923 = vadd.f32 0.0, %v1922
        %v1924 = vpop.f32.mrb[0].mxu0
        %1925 = vdwg.mxu0
        %1926 = vst.msk [vmem:[%s332] sm:$0xff] %vm429, %v1351
        %1927 = vst.msk [vmem:[%s332 + $0x8] sm:$0xff] %vm429, %v1356
        %1930 = vrot.lane.b32.xlu0 %v1432, 8
        %v1931 = vpop.permute.xlu0 %1930
        %1932 = vrot.lane.b32.xlu0 %v1437, 8
        %v1933 = vpop.permute.xlu0 %1932
        %vm1936 = vcmask 130112
        %1937 = vst.msk [vmem:[%s332] sm:$0xff] %vm1936, %v1931
        %1938 = vst.msk [vmem:[%s332 + $0x8] sm:$0xff] %vm1936, %v1933
        %1941 = vrot.lane.b32.xlu0 %v1513, 16
        %v1942 = vpop.permute.xlu0 %1941
        %1943 = vrot.lane.b32.xlu0 %v1518, 16
        %v1944 = vpop.permute.xlu0 %1943
        %vm1947 = vcmask 195712
        %1948 = vst.msk [vmem:[%s332] sm:$0xff] %vm1947, %v1942
        %1949 = vst.msk [vmem:[%s332 + $0x8] sm:$0xff] %vm1947, %v1944
        %1952 = vrot.lane.b32.xlu0 %v1594, 24
        %v1953 = vpop.permute.xlu0 %1952
        %1954 = vrot.lane.b32.xlu0 %v1599, 24
        %v1955 = vpop.permute.xlu0 %1954
        %vm1958 = vcmask 261312
        %1959 = vst.msk [vmem:[%s332] sm:$0xff] %vm1958, %v1953
        %1960 = vst.msk [vmem:[%s332 + $0x8] sm:$0xff] %vm1958, %v1955
        %1963 = vrot.lane.b32.xlu0 %v1675, 32
        %v1964 = vpop.permute.xlu0 %1963
        %1965 = vrot.lane.b32.xlu0 %v1680, 32
        %v1966 = vpop.permute.xlu0 %1965
        %vm1969 = vcmask 326912
        %1970 = vst.msk [vmem:[%s332] sm:$0xff] %vm1969, %v1964
        %1971 = vst.msk [vmem:[%s332 + $0x8] sm:$0xff] %vm1969, %v1966
        %1974 = vrot.lane.b32.xlu0 %v1756, 40
        %v1975 = vpop.permute.xlu0 %1974
        %1976 = vrot.lane.b32.xlu0 %v1761, 40
        %v1977 = vpop.permute.xlu0 %1976
        %vm1980 = vcmask 392512
        %1981 = vst.msk [vmem:[%s332] sm:$0xff] %vm1980, %v1975
        %1982 = vst.msk [vmem:[%s332 + $0x8] sm:$0xff] %vm1980, %v1977
        %1985 = vrot.lane.b32.xlu0 %v1837, 48
        %v1986 = vpop.permute.xlu0 %1985
        %1987 = vrot.lane.b32.xlu0 %v1842, 48
        %v1988 = vpop.permute.xlu0 %1987
        %vm1991 = vcmask 458112
        %1992 = vst.msk [vmem:[%s332] sm:$0xff] %vm1991, %v1986
        %1993 = vst.msk [vmem:[%s332 + $0x8] sm:$0xff] %vm1991, %v1988
        %1996 = vrot.lane.b32.xlu0 %v1918, 56
        %v1997 = vpop.permute.xlu0 %1996
        %1998 = vrot.lane.b32.xlu0 %v1923, 56
        %v1999 = vpop.permute.xlu0 %1998
        %vm2002 = vcmask 523712
        %2003 = vst.msk [vmem:[%s332] sm:$0xff] %vm2002, %v1997
        %2004 = vst.msk [vmem:[%s332 + $0x8] sm:$0xff] %vm2002, %v1999
        %2005 = vst.msk [vmem:[%s339] sm:$0xff] %vm1101, %v1247
        %2006 = vst.msk [vmem:[%s339 + $0x8] sm:$0xff] %vm1101, %v1249
        %2007 = vst.msk [vmem:[%s339 + $0x10] sm:$0xff] %vm1101, %v1251
        %2008 = vst.msk [vmem:[%s339 + $0x18] sm:$0xff] %vm1101, %v1253
        %2009 = vst.msk [vmem:[%s339 + $0x20] sm:$0xff] %vm1101, %v1255
        %2010 = vst.msk [vmem:[%s339 + $0x28] sm:$0xff] %vm1101, %v1257
        %2011 = vst.msk [vmem:[%s339 + $0x30] sm:$0xff] %vm1101, %v1259
        %2012 = vst.msk [vmem:[%s339 + $0x38] sm:$0xff] %vm1101, %v1261
        %2013 = vst.msk [vmem:[%s339 + $0x40] sm:$0xff] %vm1101, %v1263
        %2014 = vst.msk [vmem:[%s339 + $0x48] sm:$0xff] %vm1101, %v1265
        %2015 = vst.msk [vmem:[%s339 + $0x50] sm:$0xff] %vm1101, %v1267
        %2016 = vst.msk [vmem:[%s339 + $0x58] sm:$0xff] %vm1101, %v1269
        %2017 = vst.msk [vmem:[%s339 + $0x60] sm:$0xff] %vm1101, %v1271
        %2018 = vst.msk [vmem:[%s339 + $0x68] sm:$0xff] %vm1101, %v1273
        %2019 = vst.msk [vmem:[%s339 + $0x70] sm:$0xff] %vm1101, %v1275
        %2020 = vst.msk [vmem:[%s339 + $0x78] sm:$0xff] %vm1101, %v1277
        %s2021 = sand.u32 %s178, 1
        %s2022 = scalar_lea.sflag [#allocation3], %s2021
        %s2023 = sand.u32 %s178, 1
        %s2024 = smul.addr %s2023, 16
        %s2025 = scalar_lea.vmem [#allocation2], %s2024
        %s2026 = sand.u32 %s206, 1
        %s2027 = scalar_lea.sflag [#allocation5], %s2026
        %s2028 = sand.u32 %s206, 1
        %s2029 = smul.addr %s2028, 128
        %s2030 = scalar_lea.vmem [#allocation4], %s2029
        // Predicated region
        $region41: #{tpu_custom_call.1} parent=39 // pred_check
          %p2031 = pneg %p188
        $region42: #{tpu_custom_call.1} parent=39 // pred_check_branch
          %2033 = sbr.rel (%p2031) target = $region44
        $region43: #{tpu_custom_call.1} parent=39 // pred_region
          %s2034 = smul.u32 2, %s29
          %s2036 = ssub.s32 256, 256
          %2037 = vsyncadd %s2022, %s2036
          %s2038 = smul.addr %s28, 2
          %s2039 = sadd.s32 %s2034, %s2038
          %s2040 = smul.addr %s2039, 128
          %s2041 = scalar_lea.hbm %s5, %s2040
          %s2042 = sshll.u32 %s2025, 4
          %s2043 = int_to_ptr.vmem [resolvable:$true] %s2042
          %2048 = dma.vmem_to_hbm [thread:$0]  %s2043, 256, %s2041, %s2022, 128, 128, 8
        $region44: #{tpu_custom_call.1} parent=39 // pred_fallthru
          _
        // Predicated region
        $region45: #{tpu_custom_call.1} parent=39 // pred_check
          %p2049 = pneg %p216
        $region46: #{tpu_custom_call.1} parent=39 // pred_check_branch
          %2051 = sbr.rel (%p2049) target = $region48
        $region47: #{tpu_custom_call.1} parent=39 // pred_region
          %s2052 = smul.u32 2, %s29
          %s2054 = ssub.s32 2048, 2048
          %2055 = vsyncadd %s2027, %s2054
          %s2056 = smul.addr %s28, 16
          %s2057 = sadd.s32 %s2052, %s2056
          %s2058 = smul.addr %s2057, 128
          %s2059 = scalar_lea.hbm %s6, %s2058
          %s2060 = sshll.u32 %s2030, 4
          %s2061 = int_to_ptr.vmem [resolvable:$true] %s2060
          %2066 = dma.vmem_to_hbm [thread:$0]  %s2061, 2048, %s2059, %s2027, 128, 128, 8
        $region48: #{tpu_custom_call.1} parent=39 // pred_fallthru
          _
      $region40: #{tpu_custom_call.1} parent=5 // pred_fallthru
        _
      %p2067 = scmp.le.s32.totalorder 2, %s19
      // Predicated region
      $region49: #{tpu_custom_call.1} parent=5 // pred_check
        %p2068 = pneg %p2067
      $region50: #{tpu_custom_call.1} parent=5 // pred_check_branch
        %2070 = sbr.rel (%p2068) target = $region52
      $region51: #{tpu_custom_call.1} parent=5 // pred_region
        %s2071 = ssub.s32 %s19, 2
        // Predicated region
        $region53: #{tpu_custom_call.1} parent=51 // pred_check
          %p2072 = pneg %p194
        $region54: #{tpu_custom_call.1} parent=51 // pred_check_branch
          %2074 = sbr.rel (%p2072) target = $region56
        $region55: #{tpu_custom_call.1} parent=51 // pred_region
          %s2075 = sand.u32 %s179, 1
          %s2076 = scalar_lea.sflag [#allocation3], %s2075
          %s2077 = sand.u32 %s179, 1
          %s2078 = smul.addr %s2077, 16
          %s2079 = scalar_lea.vmem [#allocation2], %s2078
          %2080 = dma.done %s2076, 256
        $region56: #{tpu_custom_call.1} parent=51 // pred_fallthru
          _
        // Predicated region
        $region57: #{tpu_custom_call.1} parent=51 // pred_check
          %p2081 = pneg %p222
        $region58: #{tpu_custom_call.1} parent=51 // pred_check_branch
          %2083 = sbr.rel (%p2081) target = $region60
        $region59: #{tpu_custom_call.1} parent=51 // pred_region
          %s2084 = sand.u32 %s207, 1
          %s2085 = scalar_lea.sflag [#allocation5], %s2084
          %s2086 = sand.u32 %s207, 1
          %s2087 = smul.addr %s2086, 128
          %s2088 = scalar_lea.vmem [#allocation4], %s2087
          %2089 = dma.done %s2085, 2048
        $region60: #{tpu_custom_call.1} parent=51 // pred_fallthru
          _
      $region52: #{tpu_custom_call.1} parent=5 // pred_fallthru
        _
    $region6: #{tpu_custom_call.1} parent=1 // loop_footer
      %s23 = sadd.s32 1, %s19
    $region7: #{tpu_custom_call.1} parent=1 // loop_footer_branch
      %18 = sbr.rel target = $region3
    $region8: #{tpu_custom_call.1} parent=1 // loop_exit
      _
    %2090 = vsyncpa [#allocation3], 1
    %s2091 = scalar_lea.sflag [#allocation3], 1
    %2092 = vsyncpa %s2091, 1
    %2093 = vsyncpa [#allocation5], 1
    %s2094 = scalar_lea.sflag [#allocation5], 1
    %2095 = vsyncpa %s2094, 1

</llo_original>
